<compile_context>
chip_gen: v5e
topology: v5e:2x2
jax: 0.10.0
libtpu: 0.0.40
codegen_flags: <defaults>
</compile_context>

<pallas_src>
import functools
import math

import jax
import jax.numpy as jnp
from jax.experimental import pallas as pl
from jax.experimental.pallas import tpu as pltpu


_MAX_ACT_BLOCK_BYTES = 2 * 1024 * 1024   # ~2 MiB activation blocks (input dtype)


# ----------------------------------------------------------------------------
# Fused Head kernel: global avg-pool over D*H*W + flatten + Linear(C, N)
# Grid: (batch blocks [parallel], channel chunks [arbitrary / reduction])
# ----------------------------------------------------------------------------
def _head_kernel(x_ref, w_ref, b_ref, o_ref, *, inv_s):
    # x_ref: (b_blk, c_chunk, S)   w_ref: (c_chunk, N)
    # b_ref: (1, N)                o_ref: (b_blk, N) f32 (resident accumulator)
    ci = pl.program_id(1)

    @pl.when(ci == 0)
    def _init():
        o_ref[...] = jnp.zeros_like(o_ref)

    # Per-tile upcast: never materialises a whole-slab f32 temp.
    x = x_ref[...].astype(jnp.float32)                      # (b_blk, c_chunk, S)

    # Sum-pool over the spatial (lane) axis for this channel chunk.
    # TODO(synk): this is an XLU lane reduce; a channels-last (B,S,C) layout or
    # an MXU ones-contraction would move it to VPU/MXU, but per-chunk it
    # overlaps with the next chunk's DMA in the pipelined channel sweep.
    pooled = jnp.sum(x, axis=-1)                            # (b_blk, c_chunk)

    # Partial matmul for this channel chunk, accumulated into the resident
    # f32 output block (MXU).
    o_ref[...] += jnp.dot(pooled, w_ref[...].astype(jnp.float32),
                          preferred_element_type=jnp.float32)

    @pl.when(ci == pl.num_programs(1) - 1)
    def _finalize():
        # Fold the 1/S mean normalisation into the tiny (b_blk, N) epilogue,
        # then add the bias.
        # TODO(synk): nn.Dropout is identity at inference; training-mode
        # dropout (pltpu.prng_seed / prng_random_bits masking) not implemented.
        o_ref[...] = o_ref[...] * inv_s + b_ref[...].astype(jnp.float32)


def head_forward(params, x):
    """Head forward: AdaptiveAvgPool3d(1) -> Dropout(eval) -> flatten -> Linear.

    x: (B, C, D, H, W) feature map (f32 or bf16; bf16 recommended).
    Returns f32 logits of shape (B, num_classes).
    """
    B, C = x.shape[0], x.shape[1]
    S = int(math.prod(x.shape[2:]))
    w = params["fc_w"]                        # (C, N)
    b = params["fc_b"]                        # (N,)
    N = w.shape[-1]

    x_flat = x.reshape(B, C, S)               # contiguous reshape: no data movement

    # Batch split (keeps both v7x TensorCores busy) only when the resulting
    # block rows stay a multiple of 8 (sublane alignment of the (B, N) output).
    b_blk = B // 2 if (B >= 16 and B % 16 == 0) else B
    n_b = B // b_blk

    # Channel tiling: bound each activation block to ~2 MiB so the
    # double-buffered blocks fit every generation's scoped-VMEM default.
    c_chunk = C
    itemsize = x_flat.dtype.itemsize
    while (b_blk * c_chunk * S * itemsize > _MAX_ACT_BLOCK_BYTES
           and c_chunk % 2 == 0 and (c_chunk // 2) % 8 == 0):
        c_chunk //= 2
    n_c = C // c_chunk
    # TODO(synk): S-tiled reduction for feature maps where even a c_chunk=8
    # block exceeds the budget (not reachable at Head-sized inputs).

    kernel = functools.partial(_head_kernel, inv_s=1.0 / float(S))
    return pl.pallas_call(
        kernel,
        out_shape=jax.ShapeDtypeStruct((B, N), jnp.float32),
        grid_spec=pltpu.PrefetchScalarGridSpec(
            num_scalar_prefetch=0,
            grid=(n_b, n_c),
            in_specs=[
                pl.BlockSpec((b_blk, c_chunk, S), lambda bi, ci: (bi, ci, 0)),  # acts
                pl.BlockSpec((c_chunk, N), lambda bi, ci: (ci, 0)),             # fc weight
                pl.BlockSpec((1, N), lambda bi, ci: (0, 0)),                    # fc bias
            ],
            out_specs=pl.BlockSpec((b_blk, N), lambda bi, ci: (bi, 0)),
        ),
        compiler_params=pltpu.CompilerParams(
            dimension_semantics=("parallel", "arbitrary"),
            vmem_limit_bytes=32 * 1024 * 1024),
    )(x_flat, w, b.reshape(1, N))


# ----------------------------------------------------------------------------
# Deterministic parameter init (Linear(in_features, num_classes))
# ----------------------------------------------------------------------------
def init_params(key, in_features=1024, num_classes=106):
    fc_w = 0.02 * jax.random.normal(key, (in_features, num_classes), jnp.float32)
    fc_b = jnp.zeros((num_classes,), jnp.float32)
    return {"fc_w": fc_w, "fc_b": fc_b}


if __name__ == "__main__":
    key = jax.random.PRNGKey(0)
    kx, kp = jax.random.split(key)

    # Head of the EgoviT swin-b backbone: in_features = 1024, small final
    # feature map (B, 1024, D=2, H=7, W=7).
    B, C, D, H, W, num_classes = 2, 1024, 2, 7, 7, 106
    x = jax.random.normal(kx, (B, C, D, H, W), jnp.float32)
    params = init_params(kp, in_features=C, num_classes=num_classes)

    # Feed bf16 activations/weights from HBM (halves DMA bytes); the kernel
    # upcasts per tile, accumulates in f32 and returns f32 logits.
    x_bf = x.astype(jnp.bfloat16)
    params_bf = {"fc_w": params["fc_w"].astype(jnp.bfloat16),
                 "fc_b": params["fc_b"]}

    fwd = jax.jit(head_forward)
    logits = jax.block_until_ready(fwd(params_bf, x_bf))

    # Plain-JAX reference on the same bf16 inputs (upcast to f32):
    # avgpool -> (dropout = identity) -> flatten -> fc
    pooled_ref = jnp.mean(x_bf.astype(jnp.float32), axis=(2, 3, 4))
    ref = jnp.dot(pooled_ref, params_bf["fc_w"].astype(jnp.float32),
                  precision=jax.lax.Precision.HIGHEST) + params["fc_b"]

    assert logits.shape == (B, num_classes), logits.shape
    assert logits.dtype == jnp.float32, logits.dtype
    assert bool(jnp.all(jnp.isfinite(logits)))
    max_err = float(jnp.max(jnp.abs(logits - ref)))
    assert bool(jnp.allclose(logits, ref, atol=1e-2, rtol=1e-2)), max_err
    print("KERNEL_OK")
</pallas_src>

<mosaic_0001>
module attributes {stable_mosaic.version = 11 : i64} {
  func.func @_head_kernel(%arg0: i32, %arg1: i32, %arg2: memref<2x1024x98xbf16, #tpu.memory_space<vmem>>, %arg3: memref<1024x106xbf16, #tpu.memory_space<vmem>>, %arg4: memref<1x106xf32, #tpu.memory_space<vmem>>, %arg5: memref<2x106xf32, #tpu.memory_space<vmem>>) attributes {dimension_semantics = [#tpu.dimension_semantics<parallel>, #tpu.dimension_semantics<arbitrary>], iteration_bounds = array<i64: 1, 1>, scalar_prefetch = 0 : i64, scratch_operands = 0 : i64, tpu.core_type = #tpu.core_type<tc>, window_params = [{transform_indices = @transform_0, window_bounds = array<i64: 2, 1024, 98>}, {transform_indices = @transform_1, window_bounds = array<i64: 1024, 106>}, {pipeline_mode = #tpu.pipeline_mode<synchronous>, transform_indices = @transform_2, window_bounds = array<i64: 1, 106>}, {transform_indices = @transform_3, window_bounds = array<i64: 2, 106>}]} {
    %c0_i32 = arith.constant 0 : i32
    %0 = arith.cmpi eq, %arg1, %c0_i32 : i32
    %1 = arith.extui %0 : i1 to i32
    %c0_i32_0 = arith.constant 0 : i32
    %2 = arith.cmpi ne, %1, %c0_i32_0 : i32
    scf.if %2 {
      %cst_12 = arith.constant 0.000000e+00 : f32
      %15 = vector.broadcast %cst_12 : f32 to vector<2x106xf32>
      %c0_13 = arith.constant 0 : index
      %c0_14 = arith.constant 0 : index
      %16 = vector.load %arg5[%c0_13, %c0_14] : memref<2x106xf32, #tpu.memory_space<vmem>>, vector<2x106xf32>
      tpu.vector_store %arg5[%c0_13, %c0_14], %15 {strides = array<i32>} : memref<2x106xf32, #tpu.memory_space<vmem>>, vector<2x106xf32>,
    } else {
    }
    %c0 = arith.constant 0 : index
    %c0_1 = arith.constant 0 : index
    %c0_2 = arith.constant 0 : index
    %3 = vector.load %arg2[%c0, %c0_1, %c0_2] : memref<2x1024x98xbf16, #tpu.memory_space<vmem>>, vector<2x1024x98xbf16>
    %4 = arith.extf %3 : vector<2x1024x98xbf16> to vector<2x1024x98xf32>
    %cst = arith.constant dense<0.000000e+00> : vector<2x1024xf32>
    %5 = vector.multi_reduction <add>, %4, %cst [2] : vector<2x1024x98xf32> to vector<2x1024xf32>
    %c0_3 = arith.constant 0 : index
    %c0_4 = arith.constant 0 : index
    %6 = vector.load %arg5[%c0_3, %c0_4] : memref<2x106xf32, #tpu.memory_space<vmem>>, vector<2x106xf32>
    %c0_5 = arith.constant 0 : index
    %c0_6 = arith.constant 0 : index
    %7 = vector.load %arg3[%c0_5, %c0_6] : memref<1024x106xbf16, #tpu.memory_space<vmem>>, vector<1024x106xbf16>
    %8 = arith.extf %7 : vector<1024x106xbf16> to vector<1024x106xf32>
    %cst_7 = arith.constant dense<0.000000e+00> : vector<2x106xf32>
    %9 = tpu.matmul %5, %8, %cst_7 {dimension_numbers = #tpu.dot_dimension_numbers<[1], [0], [0], [1], [0, 0, 1, 1], [], []>} : vector<2x1024xf32>, vector<1024x106xf32>, vector<2x106xf32> -> vector<2x106xf32>
    %10 = arith.addf %6, %9 : vector<2x106xf32>
    %c0_8 = arith.constant 0 : index
    %c0_9 = arith.constant 0 : index
    %11 = vector.load %arg5[%c0_8, %c0_9] : memref<2x106xf32, #tpu.memory_space<vmem>>, vector<2x106xf32>
    tpu.vector_store %arg5[%c0_8, %c0_9], %10 {strides = array<i32>} : memref<2x106xf32, #tpu.memory_space<vmem>>, vector<2x106xf32>,
    %c0_i32_10 = arith.constant 0 : i32
    %12 = arith.cmpi eq, %arg1, %c0_i32_10 : i32
    %13 = arith.extui %12 : i1 to i32
    %c0_i32_11 = arith.constant 0 : i32
    %14 = arith.cmpi ne, %13, %c0_i32_11 : i32
    scf.if %14 {
      %c0_12 = arith.constant 0 : index
      %c0_13 = arith.constant 0 : index
      %15 = vector.load %arg5[%c0_12, %c0_13] : memref<2x106xf32, #tpu.memory_space<vmem>>, vector<2x106xf32>
      %cst_14 = arith.constant 0.0102040814 : f32
      %16 = vector.broadcast %cst_14 : f32 to vector<2x106xf32>
      %17 = arith.mulf %15, %16 : vector<2x106xf32>
      %c0_15 = arith.constant 0 : index
      %c0_16 = arith.constant 0 : index
      %18 = vector.load %arg4[%c0_15, %c0_16] : memref<1x106xf32, #tpu.memory_space<vmem>>, vector<1x106xf32>
      %19 = vector.broadcast %18 : vector<1x106xf32> to vector<2x106xf32>
      %20 = arith.addf %17, %19 : vector<2x106xf32>
      %c0_17 = arith.constant 0 : index
      %c0_18 = arith.constant 0 : index
      %21 = vector.load %arg5[%c0_17, %c0_18] : memref<2x106xf32, #tpu.memory_space<vmem>>, vector<2x106xf32>
      tpu.vector_store %arg5[%c0_17, %c0_18], %20 {strides = array<i32>} : memref<2x106xf32, #tpu.memory_space<vmem>>, vector<2x106xf32>,
    } else {
    }
    return
  }
  func.func @transform_0(%arg0: i32, %arg1: i32) -> (i32, i32, i32) {
    %c0_i32 = arith.constant 0 : i32
    %c0_i32_0 = arith.constant 0 : i32
    return %arg0, %arg1, %c0_i32 : i32, i32, i32
  }
  func.func @transform_1(%arg0: i32, %arg1: i32) -> (i32, i32) {
    %c0_i32 = arith.constant 0 : i32
    %c0_i32_0 = arith.constant 0 : i32
    return %arg1, %c0_i32 : i32, i32
  }
  func.func @transform_2(%arg0: i32, %arg1: i32) -> (i32, i32) {
    %c0_i32 = arith.constant 0 : i32
    %c0_i32_0 = arith.constant 0 : i32
    %c0_i32_1 = arith.constant 0 : i32
    return %c0_i32, %c0_i32_0 : i32, i32
  }
  func.func @transform_3(%arg0: i32, %arg1: i32) -> (i32, i32) {
    %c0_i32 = arith.constant 0 : i32
    %c0_i32_0 = arith.constant 0 : i32
    return %arg0, %c0_i32 : i32, i32
  }
}

</mosaic_0001>

<llo_original>
// kernel: head_forward.1
$region0: #{head_forward.1}
  #allocation0 [shape = 'u32[]', space=smem, size = 0x4, offset = 0x4, fixed_abs, tag = 'smem constant byte address 0x4 - core index']
  #allocation1 [shape = 'u32[72,128]{1,0:T(1,128)}', space=vmem, size = 0x9000, scoped, tag = 'internal scratch']
  %s0 = inlined_call_operand.vmem [shape: bf16[2,1024,98], index: 0, kind: input, shape index: {}]
  %s1 = inlined_call_operand.vmem [shape: bf16[1024,106], index: 1, kind: input, shape index: {}]
  %s2 = inlined_call_operand.vmem [shape: f32[1,106], index: 2, kind: input, shape index: {}]
  %s3 = inlined_call_operand.hbm [shape: f32[2,106], index: 3, kind: output, shape index: {}]
  %s4 = sld [smem:[#allocation0]]
  $region30: #{head_forward.1} parent=0
    _
  %s6 = ssub.s32 1, %s4
  %s7 = scalar_select 0, %s6, %s4
  $region1: #{head_forward.1} parent=0
    #allocation2 [shape = 'u8[1024]{0}', space=vmem, size = 0x400, scoped, tag = 'output window, operand 0, single buffered']
    #allocation3 [shape = 's32[1]{0}', space=sflag, size = 0x4, scoped, tag = 'scoped memory for head_forward.1']
    %8 = vsyncpa [#allocation3], 0
    // Predicated region
    $region2: #{head_forward.1} parent=1 // pred_check
      _
    $region3: #{head_forward.1} parent=1 // pred_check_branch
      %10 = sbr.rel (0) target = $region5
    $region4: #{head_forward.1} parent=1 // pred_region
      _
    $region5: #{head_forward.1} parent=1 // pred_fallthru
      _
    // Predicated region
    $region6: #{head_forward.1} parent=1 // pred_check
      _
    $region7: #{head_forward.1} parent=1 // pred_check_branch
      %12 = sbr.rel (0) target = $region9
    $region8: #{head_forward.1} parent=1 // pred_region
      _
    $region9: #{head_forward.1} parent=1 // pred_fallthru
      _
    // Predicated region
    $region10: #{head_forward.1} parent=1 // pred_check
      _
    $region11: #{head_forward.1} parent=1 // pred_check_branch
      %14 = sbr.rel (0) target = $region13
    $region12: #{head_forward.1} parent=1 // pred_region
      _
    $region13: #{head_forward.1} parent=1 // pred_fallthru
      _
    %p15 = scmp.eq.s32.totalorder 0, 0
    // Predicated region
    $region14: #{head_forward.1} parent=1 // pred_check
      %p16 = pneg %p15
    $region15: #{head_forward.1} parent=1 // pred_check_branch
      %18 = sbr.rel (%p16) target = $region17
    $region16: #{head_forward.1} parent=1 // pred_region
      %vm19 = vcmask 861184
      %20 = vst.msk [vmem:[#allocation2] sm:$0x3] %vm19, 0.0
    $region17: #{head_forward.1} parent=1 // pred_fallthru
      _
    %v21 = vld [vmem:[%s0] sm:$0xf]
    %v22 = vld [vmem:[%s0 + $0x4] sm:$0xf]
    %v23 = vld [vmem:[%s0 + $0x8] sm:$0xf]
    %v24 = vld [vmem:[%s0 + $0xc] sm:$0xf]
    %v25 = vld [vmem:[%s0 + $0x10] sm:$0xf]
    %v26 = vld [vmem:[%s0 + $0x14] sm:$0xf]
    %v27 = vld [vmem:[%s0 + $0x18] sm:$0xf]
    %v28 = vld [vmem:[%s0 + $0x1c] sm:$0xf]
    %v29 = vld [vmem:[%s0 + $0x20] sm:$0xf]
    %v30 = vld [vmem:[%s0 + $0x24] sm:$0xf]
    %v31 = vld [vmem:[%s0 + $0x28] sm:$0xf]
    %v32 = vld [vmem:[%s0 + $0x2c] sm:$0xf]
    %v33 = vld [vmem:[%s0 + $0x30] sm:$0xf]
    %v34 = vld [vmem:[%s0 + $0x34] sm:$0xf]
    %v35 = vld [vmem:[%s0 + $0x38] sm:$0xf]
    %v36 = vld [vmem:[%s0 + $0x3c] sm:$0xf]
    %v37 = vld [vmem:[%s0 + $0x40] sm:$0xf]
    %v38 = vld [vmem:[%s0 + $0x44] sm:$0xf]
    %v39 = vld [vmem:[%s0 + $0x48] sm:$0xf]
    %v40 = vld [vmem:[%s0 + $0x4c] sm:$0xf]
    %v41 = vld [vmem:[%s0 + $0x50] sm:$0xf]
    %v42 = vld [vmem:[%s0 + $0x54] sm:$0xf]
    %v43 = vld [vmem:[%s0 + $0x58] sm:$0xf]
    %v44 = vld [vmem:[%s0 + $0x5c] sm:$0xf]
    %v45 = vld [vmem:[%s0 + $0x60] sm:$0xf]
    %v46 = vld [vmem:[%s0 + $0x64] sm:$0xf]
    %v47 = vld [vmem:[%s0 + $0x68] sm:$0xf]
    %v48 = vld [vmem:[%s0 + $0x6c] sm:$0xf]
    %v49 = vld [vmem:[%s0 + $0x70] sm:$0xf]
    %v50 = vld [vmem:[%s0 + $0x74] sm:$0xf]
    %v51 = vld [vmem:[%s0 + $0x78] sm:$0xf]
    %v52 = vld [vmem:[%s0 + $0x7c] sm:$0xf]
    %v53 = vld [vmem:[%s0 + $0x80] sm:$0xf]
    %v54 = vld [vmem:[%s0 + $0x84] sm:$0xf]
    %v55 = vld [vmem:[%s0 + $0x88] sm:$0xf]
    %v56 = vld [vmem:[%s0 + $0x8c] sm:$0xf]
    %v57 = vld [vmem:[%s0 + $0x90] sm:$0xf]
    %v58 = vld [vmem:[%s0 + $0x94] sm:$0xf]
    %v59 = vld [vmem:[%s0 + $0x98] sm:$0xf]
    %v60 = vld [vmem:[%s0 + $0x9c] sm:$0xf]
    %v61 = vld [vmem:[%s0 + $0xa0] sm:$0xf]
    %v62 = vld [vmem:[%s0 + $0xa4] sm:$0xf]
    %v63 = vld [vmem:[%s0 + $0xa8] sm:$0xf]
    %v64 = vld [vmem:[%s0 + $0xac] sm:$0xf]
    %v65 = vld [vmem:[%s0 + $0xb0] sm:$0xf]
    %v66 = vld [vmem:[%s0 + $0xb4] sm:$0xf]
    %v67 = vld [vmem:[%s0 + $0xb8] sm:$0xf]
    %v68 = vld [vmem:[%s0 + $0xbc] sm:$0xf]
    %v69 = vld [vmem:[%s0 + $0xc0] sm:$0xf]
    %v70 = vld [vmem:[%s0 + $0xc4] sm:$0xf]
    %v71 = vld [vmem:[%s0 + $0xc8] sm:$0xf]
    %v72 = vld [vmem:[%s0 + $0xcc] sm:$0xf]
    %v73 = vld [vmem:[%s0 + $0xd0] sm:$0xf]
    %v74 = vld [vmem:[%s0 + $0xd4] sm:$0xf]
    %v75 = vld [vmem:[%s0 + $0xd8] sm:$0xf]
    %v76 = vld [vmem:[%s0 + $0xdc] sm:$0xf]
    %v77 = vld [vmem:[%s0 + $0xe0] sm:$0xf]
    %v78 = vld [vmem:[%s0 + $0xe4] sm:$0xf]
    %v79 = vld [vmem:[%s0 + $0xe8] sm:$0xf]
    %v80 = vld [vmem:[%s0 + $0xec] sm:$0xf]
    %v81 = vld [vmem:[%s0 + $0xf0] sm:$0xf]
    %v82 = vld [vmem:[%s0 + $0xf4] sm:$0xf]
    %v83 = vld [vmem:[%s0 + $0xf8] sm:$0xf]
    %v84 = vld [vmem:[%s0 + $0xfc] sm:$0xf]
    %v85 = vld [vmem:[%s0 + $0x100] sm:$0xf]
    %v86 = vld [vmem:[%s0 + $0x104] sm:$0xf]
    %v87 = vld [vmem:[%s0 + $0x108] sm:$0xf]
    %v88 = vld [vmem:[%s0 + $0x10c] sm:$0xf]
    %v89 = vld [vmem:[%s0 + $0x110] sm:$0xf]
    %v90 = vld [vmem:[%s0 + $0x114] sm:$0xf]
    %v91 = vld [vmem:[%s0 + $0x118] sm:$0xf]
    %v92 = vld [vmem:[%s0 + $0x11c] sm:$0xf]
    %v93 = vld [vmem:[%s0 + $0x120] sm:$0xf]
    %v94 = vld [vmem:[%s0 + $0x124] sm:$0xf]
    %v95 = vld [vmem:[%s0 + $0x128] sm:$0xf]
    %v96 = vld [vmem:[%s0 + $0x12c] sm:$0xf]
    %v97 = vld [vmem:[%s0 + $0x130] sm:$0xf]
    %v98 = vld [vmem:[%s0 + $0x134] sm:$0xf]
    %v99 = vld [vmem:[%s0 + $0x138] sm:$0xf]
    %v100 = vld [vmem:[%s0 + $0x13c] sm:$0xf]
    %v101 = vld [vmem:[%s0 + $0x140] sm:$0xf]
    %v102 = vld [vmem:[%s0 + $0x144] sm:$0xf]
    %v103 = vld [vmem:[%s0 + $0x148] sm:$0xf]
    %v104 = vld [vmem:[%s0 + $0x14c] sm:$0xf]
    %v105 = vld [vmem:[%s0 + $0x150] sm:$0xf]
    %v106 = vld [vmem:[%s0 + $0x154] sm:$0xf]
    %v107 = vld [vmem:[%s0 + $0x158] sm:$0xf]
    %v108 = vld [vmem:[%s0 + $0x15c] sm:$0xf]
    %v109 = vld [vmem:[%s0 + $0x160] sm:$0xf]
    %v110 = vld [vmem:[%s0 + $0x164] sm:$0xf]
    %v111 = vld [vmem:[%s0 + $0x168] sm:$0xf]
    %v112 = vld [vmem:[%s0 + $0x16c] sm:$0xf]
    %v113 = vld [vmem:[%s0 + $0x170] sm:$0xf]
    %v114 = vld [vmem:[%s0 + $0x174] sm:$0xf]
    %v115 = vld [vmem:[%s0 + $0x178] sm:$0xf]
    %v116 = vld [vmem:[%s0 + $0x17c] sm:$0xf]
    %v117 = vld [vmem:[%s0 + $0x180] sm:$0xf]
    %v118 = vld [vmem:[%s0 + $0x184] sm:$0xf]
    %v119 = vld [vmem:[%s0 + $0x188] sm:$0xf]
    %v120 = vld [vmem:[%s0 + $0x18c] sm:$0xf]
    %v121 = vld [vmem:[%s0 + $0x190] sm:$0xf]
    %v122 = vld [vmem:[%s0 + $0x194] sm:$0xf]
    %v123 = vld [vmem:[%s0 + $0x198] sm:$0xf]
    %v124 = vld [vmem:[%s0 + $0x19c] sm:$0xf]
    %v125 = vld [vmem:[%s0 + $0x1a0] sm:$0xf]
    %v126 = vld [vmem:[%s0 + $0x1a4] sm:$0xf]
    %v127 = vld [vmem:[%s0 + $0x1a8] sm:$0xf]
    %v128 = vld [vmem:[%s0 + $0x1ac] sm:$0xf]
    %v129 = vld [vmem:[%s0 + $0x1b0] sm:$0xf]
    %v130 = vld [vmem:[%s0 + $0x1b4] sm:$0xf]
    %v131 = vld [vmem:[%s0 + $0x1b8] sm:$0xf]
    %v132 = vld [vmem:[%s0 + $0x1bc] sm:$0xf]
    %v133 = vld [vmem:[%s0 + $0x1c0] sm:$0xf]
    %v134 = vld [vmem:[%s0 + $0x1c4] sm:$0xf]
    %v135 = vld [vmem:[%s0 + $0x1c8] sm:$0xf]
    %v136 = vld [vmem:[%s0 + $0x1cc] sm:$0xf]
    %v137 = vld [vmem:[%s0 + $0x1d0] sm:$0xf]
    %v138 = vld [vmem:[%s0 + $0x1d4] sm:$0xf]
    %v139 = vld [vmem:[%s0 + $0x1d8] sm:$0xf]
    %v140 = vld [vmem:[%s0 + $0x1dc] sm:$0xf]
    %v141 = vld [vmem:[%s0 + $0x1e0] sm:$0xf]
    %v142 = vld [vmem:[%s0 + $0x1e4] sm:$0xf]
    %v143 = vld [vmem:[%s0 + $0x1e8] sm:$0xf]
    %v144 = vld [vmem:[%s0 + $0x1ec] sm:$0xf]
    %v145 = vld [vmem:[%s0 + $0x1f0] sm:$0xf]
    %v146 = vld [vmem:[%s0 + $0x1f4] sm:$0xf]
    %v147 = vld [vmem:[%s0 + $0x1f8] sm:$0xf]
    %v148 = vld [vmem:[%s0 + $0x1fc] sm:$0xf]
    %v149 = vld [vmem:[%s0 + $0x200] sm:$0xf]
    %v150 = vld [vmem:[%s0 + $0x204] sm:$0xf]
    %v151 = vld [vmem:[%s0 + $0x208] sm:$0xf]
    %v152 = vld [vmem:[%s0 + $0x20c] sm:$0xf]
    %v153 = vld [vmem:[%s0 + $0x210] sm:$0xf]
    %v154 = vld [vmem:[%s0 + $0x214] sm:$0xf]
    %v155 = vld [vmem:[%s0 + $0x218] sm:$0xf]
    %v156 = vld [vmem:[%s0 + $0x21c] sm:$0xf]
    %v157 = vld [vmem:[%s0 + $0x220] sm:$0xf]
    %v158 = vld [vmem:[%s0 + $0x224] sm:$0xf]
    %v159 = vld [vmem:[%s0 + $0x228] sm:$0xf]
    %v160 = vld [vmem:[%s0 + $0x22c] sm:$0xf]
    %v161 = vld [vmem:[%s0 + $0x230] sm:$0xf]
    %v162 = vld [vmem:[%s0 + $0x234] sm:$0xf]
    %v163 = vld [vmem:[%s0 + $0x238] sm:$0xf]
    %v164 = vld [vmem:[%s0 + $0x23c] sm:$0xf]
    %v165 = vld [vmem:[%s0 + $0x240] sm:$0xf]
    %v166 = vld [vmem:[%s0 + $0x244] sm:$0xf]
    %v167 = vld [vmem:[%s0 + $0x248] sm:$0xf]
    %v168 = vld [vmem:[%s0 + $0x24c] sm:$0xf]
    %v169 = vld [vmem:[%s0 + $0x250] sm:$0xf]
    %v170 = vld [vmem:[%s0 + $0x254] sm:$0xf]
    %v171 = vld [vmem:[%s0 + $0x258] sm:$0xf]
    %v172 = vld [vmem:[%s0 + $0x25c] sm:$0xf]
    %v173 = vld [vmem:[%s0 + $0x260] sm:$0xf]
    %v174 = vld [vmem:[%s0 + $0x264] sm:$0xf]
    %v175 = vld [vmem:[%s0 + $0x268] sm:$0xf]
    %v176 = vld [vmem:[%s0 + $0x26c] sm:$0xf]
    %v177 = vld [vmem:[%s0 + $0x270] sm:$0xf]
    %v178 = vld [vmem:[%s0 + $0x274] sm:$0xf]
    %v179 = vld [vmem:[%s0 + $0x278] sm:$0xf]
    %v180 = vld [vmem:[%s0 + $0x27c] sm:$0xf]
    %v181 = vld [vmem:[%s0 + $0x280] sm:$0xf]
    %v182 = vld [vmem:[%s0 + $0x284] sm:$0xf]
    %v183 = vld [vmem:[%s0 + $0x288] sm:$0xf]
    %v184 = vld [vmem:[%s0 + $0x28c] sm:$0xf]
    %v185 = vld [vmem:[%s0 + $0x290] sm:$0xf]
    %v186 = vld [vmem:[%s0 + $0x294] sm:$0xf]
    %v187 = vld [vmem:[%s0 + $0x298] sm:$0xf]
    %v188 = vld [vmem:[%s0 + $0x29c] sm:$0xf]
    %v189 = vld [vmem:[%s0 + $0x2a0] sm:$0xf]
    %v190 = vld [vmem:[%s0 + $0x2a4] sm:$0xf]
    %v191 = vld [vmem:[%s0 + $0x2a8] sm:$0xf]
    %v192 = vld [vmem:[%s0 + $0x2ac] sm:$0xf]
    %v193 = vld [vmem:[%s0 + $0x2b0] sm:$0xf]
    %v194 = vld [vmem:[%s0 + $0x2b4] sm:$0xf]
    %v195 = vld [vmem:[%s0 + $0x2b8] sm:$0xf]
    %v196 = vld [vmem:[%s0 + $0x2bc] sm:$0xf]
    %v197 = vld [vmem:[%s0 + $0x2c0] sm:$0xf]
    %v198 = vld [vmem:[%s0 + $0x2c4] sm:$0xf]
    %v199 = vld [vmem:[%s0 + $0x2c8] sm:$0xf]
    %v200 = vld [vmem:[%s0 + $0x2cc] sm:$0xf]
    %v201 = vld [vmem:[%s0 + $0x2d0] sm:$0xf]
    %v202 = vld [vmem:[%s0 + $0x2d4] sm:$0xf]
    %v203 = vld [vmem:[%s0 + $0x2d8] sm:$0xf]
    %v204 = vld [vmem:[%s0 + $0x2dc] sm:$0xf]
    %v205 = vld [vmem:[%s0 + $0x2e0] sm:$0xf]
    %v206 = vld [vmem:[%s0 + $0x2e4] sm:$0xf]
    %v207 = vld [vmem:[%s0 + $0x2e8] sm:$0xf]
    %v208 = vld [vmem:[%s0 + $0x2ec] sm:$0xf]
    %v209 = vld [vmem:[%s0 + $0x2f0] sm:$0xf]
    %v210 = vld [vmem:[%s0 + $0x2f4] sm:$0xf]
    %v211 = vld [vmem:[%s0 + $0x2f8] sm:$0xf]
    %v212 = vld [vmem:[%s0 + $0x2fc] sm:$0xf]
    %v213 = vld [vmem:[%s0 + $0x300] sm:$0xf]
    %v214 = vld [vmem:[%s0 + $0x304] sm:$0xf]
    %v215 = vld [vmem:[%s0 + $0x308] sm:$0xf]
    %v216 = vld [vmem:[%s0 + $0x30c] sm:$0xf]
    %v217 = vld [vmem:[%s0 + $0x310] sm:$0xf]
    %v218 = vld [vmem:[%s0 + $0x314] sm:$0xf]
    %v219 = vld [vmem:[%s0 + $0x318] sm:$0xf]
    %v220 = vld [vmem:[%s0 + $0x31c] sm:$0xf]
    %v221 = vld [vmem:[%s0 + $0x320] sm:$0xf]
    %v222 = vld [vmem:[%s0 + $0x324] sm:$0xf]
    %v223 = vld [vmem:[%s0 + $0x328] sm:$0xf]
    %v224 = vld [vmem:[%s0 + $0x32c] sm:$0xf]
    %v225 = vld [vmem:[%s0 + $0x330] sm:$0xf]
    %v226 = vld [vmem:[%s0 + $0x334] sm:$0xf]
    %v227 = vld [vmem:[%s0 + $0x338] sm:$0xf]
    %v228 = vld [vmem:[%s0 + $0x33c] sm:$0xf]
    %v229 = vld [vmem:[%s0 + $0x340] sm:$0xf]
    %v230 = vld [vmem:[%s0 + $0x344] sm:$0xf]
    %v231 = vld [vmem:[%s0 + $0x348] sm:$0xf]
    %v232 = vld [vmem:[%s0 + $0x34c] sm:$0xf]
    %v233 = vld [vmem:[%s0 + $0x350] sm:$0xf]
    %v234 = vld [vmem:[%s0 + $0x354] sm:$0xf]
    %v235 = vld [vmem:[%s0 + $0x358] sm:$0xf]
    %v236 = vld [vmem:[%s0 + $0x35c] sm:$0xf]
    %v237 = vld [vmem:[%s0 + $0x360] sm:$0xf]
    %v238 = vld [vmem:[%s0 + $0x364] sm:$0xf]
    %v239 = vld [vmem:[%s0 + $0x368] sm:$0xf]
    %v240 = vld [vmem:[%s0 + $0x36c] sm:$0xf]
    %v241 = vld [vmem:[%s0 + $0x370] sm:$0xf]
    %v242 = vld [vmem:[%s0 + $0x374] sm:$0xf]
    %v243 = vld [vmem:[%s0 + $0x378] sm:$0xf]
    %v244 = vld [vmem:[%s0 + $0x37c] sm:$0xf]
    %v245 = vld [vmem:[%s0 + $0x380] sm:$0xf]
    %v246 = vld [vmem:[%s0 + $0x384] sm:$0xf]
    %v247 = vld [vmem:[%s0 + $0x388] sm:$0xf]
    %v248 = vld [vmem:[%s0 + $0x38c] sm:$0xf]
    %v249 = vld [vmem:[%s0 + $0x390] sm:$0xf]
    %v250 = vld [vmem:[%s0 + $0x394] sm:$0xf]
    %v251 = vld [vmem:[%s0 + $0x398] sm:$0xf]
    %v252 = vld [vmem:[%s0 + $0x39c] sm:$0xf]
    %v253 = vld [vmem:[%s0 + $0x3a0] sm:$0xf]
    %v254 = vld [vmem:[%s0 + $0x3a4] sm:$0xf]
    %v255 = vld [vmem:[%s0 + $0x3a8] sm:$0xf]
    %v256 = vld [vmem:[%s0 + $0x3ac] sm:$0xf]
    %v257 = vld [vmem:[%s0 + $0x3b0] sm:$0xf]
    %v258 = vld [vmem:[%s0 + $0x3b4] sm:$0xf]
    %v259 = vld [vmem:[%s0 + $0x3b8] sm:$0xf]
    %v260 = vld [vmem:[%s0 + $0x3bc] sm:$0xf]
    %v261 = vld [vmem:[%s0 + $0x3c0] sm:$0xf]
    %v262 = vld [vmem:[%s0 + $0x3c4] sm:$0xf]
    %v263 = vld [vmem:[%s0 + $0x3c8] sm:$0xf]
    %v264 = vld [vmem:[%s0 + $0x3cc] sm:$0xf]
    %v265 = vld [vmem:[%s0 + $0x3d0] sm:$0xf]
    %v266 = vld [vmem:[%s0 + $0x3d4] sm:$0xf]
    %v267 = vld [vmem:[%s0 + $0x3d8] sm:$0xf]
    %v268 = vld [vmem:[%s0 + $0x3dc] sm:$0xf]
    %v269 = vld [vmem:[%s0 + $0x3e0] sm:$0xf]
    %v270 = vld [vmem:[%s0 + $0x3e4] sm:$0xf]
    %v271 = vld [vmem:[%s0 + $0x3e8] sm:$0xf]
    %v272 = vld [vmem:[%s0 + $0x3ec] sm:$0xf]
    %v273 = vld [vmem:[%s0 + $0x3f0] sm:$0xf]
    %v274 = vld [vmem:[%s0 + $0x3f4] sm:$0xf]
    %v275 = vld [vmem:[%s0 + $0x3f8] sm:$0xf]
    %v276 = vld [vmem:[%s0 + $0x3fc] sm:$0xf]
    %v277 = vunpack.c.l.bf16 %v21
    %v278 = vunpack.c.l.bf16 %v22
    %v279 = vunpack.c.l.bf16 %v23
    %v280 = vunpack.c.l.bf16 %v24
    %v281 = vunpack.c.l.bf16 %v25
    %v282 = vunpack.c.l.bf16 %v26
    %v283 = vunpack.c.l.bf16 %v27
    %v284 = vunpack.c.l.bf16 %v28
    %v285 = vunpack.c.l.bf16 %v29
    %v286 = vunpack.c.l.bf16 %v30
    %v287 = vunpack.c.l.bf16 %v31
    %v288 = vunpack.c.l.bf16 %v32
    %v289 = vunpack.c.l.bf16 %v33
    %v290 = vunpack.c.l.bf16 %v34
    %v291 = vunpack.c.l.bf16 %v35
    %v292 = vunpack.c.l.bf16 %v36
    %v293 = vunpack.c.l.bf16 %v37
    %v294 = vunpack.c.l.bf16 %v38
    %v295 = vunpack.c.l.bf16 %v39
    %v296 = vunpack.c.l.bf16 %v40
    %v297 = vunpack.c.l.bf16 %v41
    %v298 = vunpack.c.l.bf16 %v42
    %v299 = vunpack.c.l.bf16 %v43
    %v300 = vunpack.c.l.bf16 %v44
    %v301 = vunpack.c.l.bf16 %v45
    %v302 = vunpack.c.l.bf16 %v46
    %v303 = vunpack.c.l.bf16 %v47
    %v304 = vunpack.c.l.bf16 %v48
    %v305 = vunpack.c.l.bf16 %v49
    %v306 = vunpack.c.l.bf16 %v50
    %v307 = vunpack.c.l.bf16 %v51
    %v308 = vunpack.c.l.bf16 %v52
    %v309 = vunpack.c.l.bf16 %v53
    %v310 = vunpack.c.l.bf16 %v54
    %v311 = vunpack.c.l.bf16 %v55
    %v312 = vunpack.c.l.bf16 %v56
    %v313 = vunpack.c.l.bf16 %v57
    %v314 = vunpack.c.l.bf16 %v58
    %v315 = vunpack.c.l.bf16 %v59
    %v316 = vunpack.c.l.bf16 %v60
    %v317 = vunpack.c.l.bf16 %v61
    %v318 = vunpack.c.l.bf16 %v62
    %v319 = vunpack.c.l.bf16 %v63
    %v320 = vunpack.c.l.bf16 %v64
    %v321 = vunpack.c.l.bf16 %v65
    %v322 = vunpack.c.l.bf16 %v66
    %v323 = vunpack.c.l.bf16 %v67
    %v324 = vunpack.c.l.bf16 %v68
    %v325 = vunpack.c.l.bf16 %v69
    %v326 = vunpack.c.l.bf16 %v70
    %v327 = vunpack.c.l.bf16 %v71
    %v328 = vunpack.c.l.bf16 %v72
    %v329 = vunpack.c.l.bf16 %v73
    %v330 = vunpack.c.l.bf16 %v74
    %v331 = vunpack.c.l.bf16 %v75
    %v332 = vunpack.c.l.bf16 %v76
    %v333 = vunpack.c.l.bf16 %v77
    %v334 = vunpack.c.l.bf16 %v78
    %v335 = vunpack.c.l.bf16 %v79
    %v336 = vunpack.c.l.bf16 %v80
    %v337 = vunpack.c.l.bf16 %v81
    %v338 = vunpack.c.l.bf16 %v82
    %v339 = vunpack.c.l.bf16 %v83
    %v340 = vunpack.c.l.bf16 %v84
    %v341 = vunpack.c.l.bf16 %v85
    %v342 = vunpack.c.l.bf16 %v86
    %v343 = vunpack.c.l.bf16 %v87
    %v344 = vunpack.c.l.bf16 %v88
    %v345 = vunpack.c.l.bf16 %v89
    %v346 = vunpack.c.l.bf16 %v90
    %v347 = vunpack.c.l.bf16 %v91
    %v348 = vunpack.c.l.bf16 %v92
    %v349 = vunpack.c.l.bf16 %v93
    %v350 = vunpack.c.l.bf16 %v94
    %v351 = vunpack.c.l.bf16 %v95
    %v352 = vunpack.c.l.bf16 %v96
    %v353 = vunpack.c.l.bf16 %v97
    %v354 = vunpack.c.l.bf16 %v98
    %v355 = vunpack.c.l.bf16 %v99
    %v356 = vunpack.c.l.bf16 %v100
    %v357 = vunpack.c.l.bf16 %v101
    %v358 = vunpack.c.l.bf16 %v102
    %v359 = vunpack.c.l.bf16 %v103
    %v360 = vunpack.c.l.bf16 %v104
    %v361 = vunpack.c.l.bf16 %v105
    %v362 = vunpack.c.l.bf16 %v106
    %v363 = vunpack.c.l.bf16 %v107
    %v364 = vunpack.c.l.bf16 %v108
    %v365 = vunpack.c.l.bf16 %v109
    %v366 = vunpack.c.l.bf16 %v110
    %v367 = vunpack.c.l.bf16 %v111
    %v368 = vunpack.c.l.bf16 %v112
    %v369 = vunpack.c.l.bf16 %v113
    %v370 = vunpack.c.l.bf16 %v114
    %v371 = vunpack.c.l.bf16 %v115
    %v372 = vunpack.c.l.bf16 %v116
    %v373 = vunpack.c.l.bf16 %v117
    %v374 = vunpack.c.l.bf16 %v118
    %v375 = vunpack.c.l.bf16 %v119
    %v376 = vunpack.c.l.bf16 %v120
    %v377 = vunpack.c.l.bf16 %v121
    %v378 = vunpack.c.l.bf16 %v122
    %v379 = vunpack.c.l.bf16 %v123
    %v380 = vunpack.c.l.bf16 %v124
    %v381 = vunpack.c.l.bf16 %v125
    %v382 = vunpack.c.l.bf16 %v126
    %v383 = vunpack.c.l.bf16 %v127
    %v384 = vunpack.c.l.bf16 %v128
    %v385 = vunpack.c.l.bf16 %v129
    %v386 = vunpack.c.l.bf16 %v130
    %v387 = vunpack.c.l.bf16 %v131
    %v388 = vunpack.c.l.bf16 %v132
    %v389 = vunpack.c.l.bf16 %v133
    %v390 = vunpack.c.l.bf16 %v134
    %v391 = vunpack.c.l.bf16 %v135
    %v392 = vunpack.c.l.bf16 %v136
    %v393 = vunpack.c.l.bf16 %v137
    %v394 = vunpack.c.l.bf16 %v138
    %v395 = vunpack.c.l.bf16 %v139
    %v396 = vunpack.c.l.bf16 %v140
    %v397 = vunpack.c.l.bf16 %v141
    %v398 = vunpack.c.l.bf16 %v142
    %v399 = vunpack.c.l.bf16 %v143
    %v400 = vunpack.c.l.bf16 %v144
    %v401 = vunpack.c.l.bf16 %v145
    %v402 = vunpack.c.l.bf16 %v146
    %v403 = vunpack.c.l.bf16 %v147
    %v404 = vunpack.c.l.bf16 %v148
    %v405 = vunpack.c.l.bf16 %v149
    %v406 = vunpack.c.l.bf16 %v150
    %v407 = vunpack.c.l.bf16 %v151
    %v408 = vunpack.c.l.bf16 %v152
    %v409 = vunpack.c.l.bf16 %v153
    %v410 = vunpack.c.l.bf16 %v154
    %v411 = vunpack.c.l.bf16 %v155
    %v412 = vunpack.c.l.bf16 %v156
    %v413 = vunpack.c.l.bf16 %v157
    %v414 = vunpack.c.l.bf16 %v158
    %v415 = vunpack.c.l.bf16 %v159
    %v416 = vunpack.c.l.bf16 %v160
    %v417 = vunpack.c.l.bf16 %v161
    %v418 = vunpack.c.l.bf16 %v162
    %v419 = vunpack.c.l.bf16 %v163
    %v420 = vunpack.c.l.bf16 %v164
    %v421 = vunpack.c.l.bf16 %v165
    %v422 = vunpack.c.l.bf16 %v166
    %v423 = vunpack.c.l.bf16 %v167
    %v424 = vunpack.c.l.bf16 %v168
    %v425 = vunpack.c.l.bf16 %v169
    %v426 = vunpack.c.l.bf16 %v170
    %v427 = vunpack.c.l.bf16 %v171
    %v428 = vunpack.c.l.bf16 %v172
    %v429 = vunpack.c.l.bf16 %v173
    %v430 = vunpack.c.l.bf16 %v174
    %v431 = vunpack.c.l.bf16 %v175
    %v432 = vunpack.c.l.bf16 %v176
    %v433 = vunpack.c.l.bf16 %v177
    %v434 = vunpack.c.l.bf16 %v178
    %v435 = vunpack.c.l.bf16 %v179
    %v436 = vunpack.c.l.bf16 %v180
    %v437 = vunpack.c.l.bf16 %v181
    %v438 = vunpack.c.l.bf16 %v182
    %v439 = vunpack.c.l.bf16 %v183
    %v440 = vunpack.c.l.bf16 %v184
    %v441 = vunpack.c.l.bf16 %v185
    %v442 = vunpack.c.l.bf16 %v186
    %v443 = vunpack.c.l.bf16 %v187
    %v444 = vunpack.c.l.bf16 %v188
    %v445 = vunpack.c.l.bf16 %v189
    %v446 = vunpack.c.l.bf16 %v190
    %v447 = vunpack.c.l.bf16 %v191
    %v448 = vunpack.c.l.bf16 %v192
    %v449 = vunpack.c.l.bf16 %v193
    %v450 = vunpack.c.l.bf16 %v194
    %v451 = vunpack.c.l.bf16 %v195
    %v452 = vunpack.c.l.bf16 %v196
    %v453 = vunpack.c.l.bf16 %v197
    %v454 = vunpack.c.l.bf16 %v198
    %v455 = vunpack.c.l.bf16 %v199
    %v456 = vunpack.c.l.bf16 %v200
    %v457 = vunpack.c.l.bf16 %v201
    %v458 = vunpack.c.l.bf16 %v202
    %v459 = vunpack.c.l.bf16 %v203
    %v460 = vunpack.c.l.bf16 %v204
    %v461 = vunpack.c.l.bf16 %v205
    %v462 = vunpack.c.l.bf16 %v206
    %v463 = vunpack.c.l.bf16 %v207
    %v464 = vunpack.c.l.bf16 %v208
    %v465 = vunpack.c.l.bf16 %v209
    %v466 = vunpack.c.l.bf16 %v210
    %v467 = vunpack.c.l.bf16 %v211
    %v468 = vunpack.c.l.bf16 %v212
    %v469 = vunpack.c.l.bf16 %v213
    %v470 = vunpack.c.l.bf16 %v214
    %v471 = vunpack.c.l.bf16 %v215
    %v472 = vunpack.c.l.bf16 %v216
    %v473 = vunpack.c.l.bf16 %v217
    %v474 = vunpack.c.l.bf16 %v218
    %v475 = vunpack.c.l.bf16 %v219
    %v476 = vunpack.c.l.bf16 %v220
    %v477 = vunpack.c.l.bf16 %v221
    %v478 = vunpack.c.l.bf16 %v222
    %v479 = vunpack.c.l.bf16 %v223
    %v480 = vunpack.c.l.bf16 %v224
    %v481 = vunpack.c.l.bf16 %v225
    %v482 = vunpack.c.l.bf16 %v226
    %v483 = vunpack.c.l.bf16 %v227
    %v484 = vunpack.c.l.bf16 %v228
    %v485 = vunpack.c.l.bf16 %v229
    %v486 = vunpack.c.l.bf16 %v230
    %v487 = vunpack.c.l.bf16 %v231
    %v488 = vunpack.c.l.bf16 %v232
    %v489 = vunpack.c.l.bf16 %v233
    %v490 = vunpack.c.l.bf16 %v234
    %v491 = vunpack.c.l.bf16 %v235
    %v492 = vunpack.c.l.bf16 %v236
    %v493 = vunpack.c.l.bf16 %v237
    %v494 = vunpack.c.l.bf16 %v238
    %v495 = vunpack.c.l.bf16 %v239
    %v496 = vunpack.c.l.bf16 %v240
    %v497 = vunpack.c.l.bf16 %v241
    %v498 = vunpack.c.l.bf16 %v242
    %v499 = vunpack.c.l.bf16 %v243
    %v500 = vunpack.c.l.bf16 %v244
    %v501 = vunpack.c.l.bf16 %v245
    %v502 = vunpack.c.l.bf16 %v246
    %v503 = vunpack.c.l.bf16 %v247
    %v504 = vunpack.c.l.bf16 %v248
    %v505 = vunpack.c.l.bf16 %v249
    %v506 = vunpack.c.l.bf16 %v250
    %v507 = vunpack.c.l.bf16 %v251
    %v508 = vunpack.c.l.bf16 %v252
    %v509 = vunpack.c.l.bf16 %v253
    %v510 = vunpack.c.l.bf16 %v254
    %v511 = vunpack.c.l.bf16 %v255
    %v512 = vunpack.c.l.bf16 %v256
    %v513 = vunpack.c.l.bf16 %v257
    %v514 = vunpack.c.l.bf16 %v258
    %v515 = vunpack.c.l.bf16 %v259
    %v516 = vunpack.c.l.bf16 %v260
    %v517 = vunpack.c.l.bf16 %v261
    %v518 = vunpack.c.l.bf16 %v262
    %v519 = vunpack.c.l.bf16 %v263
    %v520 = vunpack.c.l.bf16 %v264
    %v521 = vunpack.c.l.bf16 %v265
    %v522 = vunpack.c.l.bf16 %v266
    %v523 = vunpack.c.l.bf16 %v267
    %v524 = vunpack.c.l.bf16 %v268
    %v525 = vunpack.c.l.bf16 %v269
    %v526 = vunpack.c.l.bf16 %v270
    %v527 = vunpack.c.l.bf16 %v271
    %v528 = vunpack.c.l.bf16 %v272
    %v529 = vunpack.c.l.bf16 %v273
    %v530 = vunpack.c.l.bf16 %v274
    %v531 = vunpack.c.l.bf16 %v275
    %v532 = vunpack.c.l.bf16 %v276
    %vm533 = vcmask 801792
    %v534 = vsel %vm533, %v277, 0.0
    %535 = vadd.xlane.f32.xlu0 %v534
    %v536 = vpop.xlane.xlu0 %535
    %v537 = vsel %vm533, %v278, 0.0
    %538 = vadd.xlane.f32.xlu0 %v537
    %v539 = vpop.xlane.xlu0 %538
    %v540 = vsel %vm533, %v279, 0.0
    %541 = vadd.xlane.f32.xlu0 %v540
    %v542 = vpop.xlane.xlu0 %541
    %v543 = vsel %vm533, %v280, 0.0
    %544 = vadd.xlane.f32.xlu0 %v543
    %v545 = vpop.xlane.xlu0 %544
    %v546 = vsel %vm533, %v281, 0.0
    %547 = vadd.xlane.f32.xlu0 %v546
    %v548 = vpop.xlane.xlu0 %547
    %v549 = vsel %vm533, %v282, 0.0
    %550 = vadd.xlane.f32.xlu0 %v549
    %v551 = vpop.xlane.xlu0 %550
    %v552 = vsel %vm533, %v283, 0.0
    %553 = vadd.xlane.f32.xlu0 %v552
    %v554 = vpop.xlane.xlu0 %553
    %v555 = vsel %vm533, %v284, 0.0
    %556 = vadd.xlane.f32.xlu0 %v555
    %v557 = vpop.xlane.xlu0 %556
    %v558 = vsel %vm533, %v285, 0.0
    %559 = vadd.xlane.f32.xlu0 %v558
    %v560 = vpop.xlane.xlu0 %559
    %v561 = vsel %vm533, %v286, 0.0
    %562 = vadd.xlane.f32.xlu0 %v561
    %v563 = vpop.xlane.xlu0 %562
    %v564 = vsel %vm533, %v287, 0.0
    %565 = vadd.xlane.f32.xlu0 %v564
    %v566 = vpop.xlane.xlu0 %565
    %v567 = vsel %vm533, %v288, 0.0
    %568 = vadd.xlane.f32.xlu0 %v567
    %v569 = vpop.xlane.xlu0 %568
    %v570 = vsel %vm533, %v289, 0.0
    %571 = vadd.xlane.f32.xlu0 %v570
    %v572 = vpop.xlane.xlu0 %571
    %v573 = vsel %vm533, %v290, 0.0
    %574 = vadd.xlane.f32.xlu0 %v573
    %v575 = vpop.xlane.xlu0 %574
    %v576 = vsel %vm533, %v291, 0.0
    %577 = vadd.xlane.f32.xlu0 %v576
    %v578 = vpop.xlane.xlu0 %577
    %v579 = vsel %vm533, %v292, 0.0
    %580 = vadd.xlane.f32.xlu0 %v579
    %v581 = vpop.xlane.xlu0 %580
    %v582 = vsel %vm533, %v293, 0.0
    %583 = vadd.xlane.f32.xlu0 %v582
    %v584 = vpop.xlane.xlu0 %583
    %v585 = vsel %vm533, %v294, 0.0
    %586 = vadd.xlane.f32.xlu0 %v585
    %v587 = vpop.xlane.xlu0 %586
    %v588 = vsel %vm533, %v295, 0.0
    %589 = vadd.xlane.f32.xlu0 %v588
    %v590 = vpop.xlane.xlu0 %589
    %v591 = vsel %vm533, %v296, 0.0
    %592 = vadd.xlane.f32.xlu0 %v591
    %v593 = vpop.xlane.xlu0 %592
    %v594 = vsel %vm533, %v297, 0.0
    %595 = vadd.xlane.f32.xlu0 %v594
    %v596 = vpop.xlane.xlu0 %595
    %v597 = vsel %vm533, %v298, 0.0
    %598 = vadd.xlane.f32.xlu0 %v597
    %v599 = vpop.xlane.xlu0 %598
    %v600 = vsel %vm533, %v299, 0.0
    %601 = vadd.xlane.f32.xlu0 %v600
    %v602 = vpop.xlane.xlu0 %601
    %v603 = vsel %vm533, %v300, 0.0
    %604 = vadd.xlane.f32.xlu0 %v603
    %v605 = vpop.xlane.xlu0 %604
    %v606 = vsel %vm533, %v301, 0.0
    %607 = vadd.xlane.f32.xlu0 %v606
    %v608 = vpop.xlane.xlu0 %607
    %v609 = vsel %vm533, %v302, 0.0
    %610 = vadd.xlane.f32.xlu0 %v609
    %v611 = vpop.xlane.xlu0 %610
    %v612 = vsel %vm533, %v303, 0.0
    %613 = vadd.xlane.f32.xlu0 %v612
    %v614 = vpop.xlane.xlu0 %613
    %v615 = vsel %vm533, %v304, 0.0
    %616 = vadd.xlane.f32.xlu0 %v615
    %v617 = vpop.xlane.xlu0 %616
    %v618 = vsel %vm533, %v305, 0.0
    %619 = vadd.xlane.f32.xlu0 %v618
    %v620 = vpop.xlane.xlu0 %619
    %v621 = vsel %vm533, %v306, 0.0
    %622 = vadd.xlane.f32.xlu0 %v621
    %v623 = vpop.xlane.xlu0 %622
    %v624 = vsel %vm533, %v307, 0.0
    %625 = vadd.xlane.f32.xlu0 %v624
    %v626 = vpop.xlane.xlu0 %625
    %v627 = vsel %vm533, %v308, 0.0
    %628 = vadd.xlane.f32.xlu0 %v627
    %v629 = vpop.xlane.xlu0 %628
    %v630 = vsel %vm533, %v309, 0.0
    %631 = vadd.xlane.f32.xlu0 %v630
    %v632 = vpop.xlane.xlu0 %631
    %v633 = vsel %vm533, %v310, 0.0
    %634 = vadd.xlane.f32.xlu0 %v633
    %v635 = vpop.xlane.xlu0 %634
    %v636 = vsel %vm533, %v311, 0.0
    %637 = vadd.xlane.f32.xlu0 %v636
    %v638 = vpop.xlane.xlu0 %637
    %v639 = vsel %vm533, %v312, 0.0
    %640 = vadd.xlane.f32.xlu0 %v639
    %v641 = vpop.xlane.xlu0 %640
    %v642 = vsel %vm533, %v313, 0.0
    %643 = vadd.xlane.f32.xlu0 %v642
    %v644 = vpop.xlane.xlu0 %643
    %v645 = vsel %vm533, %v314, 0.0
    %646 = vadd.xlane.f32.xlu0 %v645
    %v647 = vpop.xlane.xlu0 %646
    %v648 = vsel %vm533, %v315, 0.0
    %649 = vadd.xlane.f32.xlu0 %v648
    %v650 = vpop.xlane.xlu0 %649
    %v651 = vsel %vm533, %v316, 0.0
    %652 = vadd.xlane.f32.xlu0 %v651
    %v653 = vpop.xlane.xlu0 %652
    %v654 = vsel %vm533, %v317, 0.0
    %655 = vadd.xlane.f32.xlu0 %v654
    %v656 = vpop.xlane.xlu0 %655
    %v657 = vsel %vm533, %v318, 0.0
    %658 = vadd.xlane.f32.xlu0 %v657
    %v659 = vpop.xlane.xlu0 %658
    %v660 = vsel %vm533, %v319, 0.0
    %661 = vadd.xlane.f32.xlu0 %v660
    %v662 = vpop.xlane.xlu0 %661
    %v663 = vsel %vm533, %v320, 0.0
    %664 = vadd.xlane.f32.xlu0 %v663
    %v665 = vpop.xlane.xlu0 %664
    %v666 = vsel %vm533, %v321, 0.0
    %667 = vadd.xlane.f32.xlu0 %v666
    %v668 = vpop.xlane.xlu0 %667
    %v669 = vsel %vm533, %v322, 0.0
    %670 = vadd.xlane.f32.xlu0 %v669
    %v671 = vpop.xlane.xlu0 %670
    %v672 = vsel %vm533, %v323, 0.0
    %673 = vadd.xlane.f32.xlu0 %v672
    %v674 = vpop.xlane.xlu0 %673
    %v675 = vsel %vm533, %v324, 0.0
    %676 = vadd.xlane.f32.xlu0 %v675
    %v677 = vpop.xlane.xlu0 %676
    %v678 = vsel %vm533, %v325, 0.0
    %679 = vadd.xlane.f32.xlu0 %v678
    %v680 = vpop.xlane.xlu0 %679
    %v681 = vsel %vm533, %v326, 0.0
    %682 = vadd.xlane.f32.xlu0 %v681
    %v683 = vpop.xlane.xlu0 %682
    %v684 = vsel %vm533, %v327, 0.0
    %685 = vadd.xlane.f32.xlu0 %v684
    %v686 = vpop.xlane.xlu0 %685
    %v687 = vsel %vm533, %v328, 0.0
    %688 = vadd.xlane.f32.xlu0 %v687
    %v689 = vpop.xlane.xlu0 %688
    %v690 = vsel %vm533, %v329, 0.0
    %691 = vadd.xlane.f32.xlu0 %v690
    %v692 = vpop.xlane.xlu0 %691
    %v693 = vsel %vm533, %v330, 0.0
    %694 = vadd.xlane.f32.xlu0 %v693
    %v695 = vpop.xlane.xlu0 %694
    %v696 = vsel %vm533, %v331, 0.0
    %697 = vadd.xlane.f32.xlu0 %v696
    %v698 = vpop.xlane.xlu0 %697
    %v699 = vsel %vm533, %v332, 0.0
    %700 = vadd.xlane.f32.xlu0 %v699
    %v701 = vpop.xlane.xlu0 %700
    %v702 = vsel %vm533, %v333, 0.0
    %703 = vadd.xlane.f32.xlu0 %v702
    %v704 = vpop.xlane.xlu0 %703
    %v705 = vsel %vm533, %v334, 0.0
    %706 = vadd.xlane.f32.xlu0 %v705
    %v707 = vpop.xlane.xlu0 %706
    %v708 = vsel %vm533, %v335, 0.0
    %709 = vadd.xlane.f32.xlu0 %v708
    %v710 = vpop.xlane.xlu0 %709
    %v711 = vsel %vm533, %v336, 0.0
    %712 = vadd.xlane.f32.xlu0 %v711
    %v713 = vpop.xlane.xlu0 %712
    %v714 = vsel %vm533, %v337, 0.0
    %715 = vadd.xlane.f32.xlu0 %v714
    %v716 = vpop.xlane.xlu0 %715
    %v717 = vsel %vm533, %v338, 0.0
    %718 = vadd.xlane.f32.xlu0 %v717
    %v719 = vpop.xlane.xlu0 %718
    %v720 = vsel %vm533, %v339, 0.0
    %721 = vadd.xlane.f32.xlu0 %v720
    %v722 = vpop.xlane.xlu0 %721
    %v723 = vsel %vm533, %v340, 0.0
    %724 = vadd.xlane.f32.xlu0 %v723
    %v725 = vpop.xlane.xlu0 %724
    %v726 = vsel %vm533, %v341, 0.0
    %727 = vadd.xlane.f32.xlu0 %v726
    %v728 = vpop.xlane.xlu0 %727
    %v729 = vsel %vm533, %v342, 0.0
    %730 = vadd.xlane.f32.xlu0 %v729
    %v731 = vpop.xlane.xlu0 %730
    %v732 = vsel %vm533, %v343, 0.0
    %733 = vadd.xlane.f32.xlu0 %v732
    %v734 = vpop.xlane.xlu0 %733
    %v735 = vsel %vm533, %v344, 0.0
    %736 = vadd.xlane.f32.xlu0 %v735
    %v737 = vpop.xlane.xlu0 %736
    %v738 = vsel %vm533, %v345, 0.0
    %739 = vadd.xlane.f32.xlu0 %v738
    %v740 = vpop.xlane.xlu0 %739
    %v741 = vsel %vm533, %v346, 0.0
    %742 = vadd.xlane.f32.xlu0 %v741
    %v743 = vpop.xlane.xlu0 %742
    %v744 = vsel %vm533, %v347, 0.0
    %745 = vadd.xlane.f32.xlu0 %v744
    %v746 = vpop.xlane.xlu0 %745
    %v747 = vsel %vm533, %v348, 0.0
    %748 = vadd.xlane.f32.xlu0 %v747
    %v749 = vpop.xlane.xlu0 %748
    %v750 = vsel %vm533, %v349, 0.0
    %751 = vadd.xlane.f32.xlu0 %v750
    %v752 = vpop.xlane.xlu0 %751
    %v753 = vsel %vm533, %v350, 0.0
    %754 = vadd.xlane.f32.xlu0 %v753
    %v755 = vpop.xlane.xlu0 %754
    %v756 = vsel %vm533, %v351, 0.0
    %757 = vadd.xlane.f32.xlu0 %v756
    %v758 = vpop.xlane.xlu0 %757
    %v759 = vsel %vm533, %v352, 0.0
    %760 = vadd.xlane.f32.xlu0 %v759
    %v761 = vpop.xlane.xlu0 %760
    %v762 = vsel %vm533, %v353, 0.0
    %763 = vadd.xlane.f32.xlu0 %v762
    %v764 = vpop.xlane.xlu0 %763
    %v765 = vsel %vm533, %v354, 0.0
    %766 = vadd.xlane.f32.xlu0 %v765
    %v767 = vpop.xlane.xlu0 %766
    %v768 = vsel %vm533, %v355, 0.0
    %769 = vadd.xlane.f32.xlu0 %v768
    %v770 = vpop.xlane.xlu0 %769
    %v771 = vsel %vm533, %v356, 0.0
    %772 = vadd.xlane.f32.xlu0 %v771
    %v773 = vpop.xlane.xlu0 %772
    %v774 = vsel %vm533, %v357, 0.0
    %775 = vadd.xlane.f32.xlu0 %v774
    %v776 = vpop.xlane.xlu0 %775
    %v777 = vsel %vm533, %v358, 0.0
    %778 = vadd.xlane.f32.xlu0 %v777
    %v779 = vpop.xlane.xlu0 %778
    %v780 = vsel %vm533, %v359, 0.0
    %781 = vadd.xlane.f32.xlu0 %v780
    %v782 = vpop.xlane.xlu0 %781
    %v783 = vsel %vm533, %v360, 0.0
    %784 = vadd.xlane.f32.xlu0 %v783
    %v785 = vpop.xlane.xlu0 %784
    %v786 = vsel %vm533, %v361, 0.0
    %787 = vadd.xlane.f32.xlu0 %v786
    %v788 = vpop.xlane.xlu0 %787
    %v789 = vsel %vm533, %v362, 0.0
    %790 = vadd.xlane.f32.xlu0 %v789
    %v791 = vpop.xlane.xlu0 %790
    %v792 = vsel %vm533, %v363, 0.0
    %793 = vadd.xlane.f32.xlu0 %v792
    %v794 = vpop.xlane.xlu0 %793
    %v795 = vsel %vm533, %v364, 0.0
    %796 = vadd.xlane.f32.xlu0 %v795
    %v797 = vpop.xlane.xlu0 %796
    %v798 = vsel %vm533, %v365, 0.0
    %799 = vadd.xlane.f32.xlu0 %v798
    %v800 = vpop.xlane.xlu0 %799
    %v801 = vsel %vm533, %v366, 0.0
    %802 = vadd.xlane.f32.xlu0 %v801
    %v803 = vpop.xlane.xlu0 %802
    %v804 = vsel %vm533, %v367, 0.0
    %805 = vadd.xlane.f32.xlu0 %v804
    %v806 = vpop.xlane.xlu0 %805
    %v807 = vsel %vm533, %v368, 0.0
    %808 = vadd.xlane.f32.xlu0 %v807
    %v809 = vpop.xlane.xlu0 %808
    %v810 = vsel %vm533, %v369, 0.0
    %811 = vadd.xlane.f32.xlu0 %v810
    %v812 = vpop.xlane.xlu0 %811
    %v813 = vsel %vm533, %v370, 0.0
    %814 = vadd.xlane.f32.xlu0 %v813
    %v815 = vpop.xlane.xlu0 %814
    %v816 = vsel %vm533, %v371, 0.0
    %817 = vadd.xlane.f32.xlu0 %v816
    %v818 = vpop.xlane.xlu0 %817
    %v819 = vsel %vm533, %v372, 0.0
    %820 = vadd.xlane.f32.xlu0 %v819
    %v821 = vpop.xlane.xlu0 %820
    %v822 = vsel %vm533, %v373, 0.0
    %823 = vadd.xlane.f32.xlu0 %v822
    %v824 = vpop.xlane.xlu0 %823
    %v825 = vsel %vm533, %v374, 0.0
    %826 = vadd.xlane.f32.xlu0 %v825
    %v827 = vpop.xlane.xlu0 %826
    %v828 = vsel %vm533, %v375, 0.0
    %829 = vadd.xlane.f32.xlu0 %v828
    %v830 = vpop.xlane.xlu0 %829
    %v831 = vsel %vm533, %v376, 0.0
    %832 = vadd.xlane.f32.xlu0 %v831
    %v833 = vpop.xlane.xlu0 %832
    %v834 = vsel %vm533, %v377, 0.0
    %835 = vadd.xlane.f32.xlu0 %v834
    %v836 = vpop.xlane.xlu0 %835
    %v837 = vsel %vm533, %v378, 0.0
    %838 = vadd.xlane.f32.xlu0 %v837
    %v839 = vpop.xlane.xlu0 %838
    %v840 = vsel %vm533, %v379, 0.0
    %841 = vadd.xlane.f32.xlu0 %v840
    %v842 = vpop.xlane.xlu0 %841
    %v843 = vsel %vm533, %v380, 0.0
    %844 = vadd.xlane.f32.xlu0 %v843
    %v845 = vpop.xlane.xlu0 %844
    %v846 = vsel %vm533, %v381, 0.0
    %847 = vadd.xlane.f32.xlu0 %v846
    %v848 = vpop.xlane.xlu0 %847
    %v849 = vsel %vm533, %v382, 0.0
    %850 = vadd.xlane.f32.xlu0 %v849
    %v851 = vpop.xlane.xlu0 %850
    %v852 = vsel %vm533, %v383, 0.0
    %853 = vadd.xlane.f32.xlu0 %v852
    %v854 = vpop.xlane.xlu0 %853
    %v855 = vsel %vm533, %v384, 0.0
    %856 = vadd.xlane.f32.xlu0 %v855
    %v857 = vpop.xlane.xlu0 %856
    %v858 = vsel %vm533, %v385, 0.0
    %859 = vadd.xlane.f32.xlu0 %v858
    %v860 = vpop.xlane.xlu0 %859
    %v861 = vsel %vm533, %v386, 0.0
    %862 = vadd.xlane.f32.xlu0 %v861
    %v863 = vpop.xlane.xlu0 %862
    %v864 = vsel %vm533, %v387, 0.0
    %865 = vadd.xlane.f32.xlu0 %v864
    %v866 = vpop.xlane.xlu0 %865
    %v867 = vsel %vm533, %v388, 0.0
    %868 = vadd.xlane.f32.xlu0 %v867
    %v869 = vpop.xlane.xlu0 %868
    %v870 = vsel %vm533, %v389, 0.0
    %871 = vadd.xlane.f32.xlu0 %v870
    %v872 = vpop.xlane.xlu0 %871
    %v873 = vsel %vm533, %v390, 0.0
    %874 = vadd.xlane.f32.xlu0 %v873
    %v875 = vpop.xlane.xlu0 %874
    %v876 = vsel %vm533, %v391, 0.0
    %877 = vadd.xlane.f32.xlu0 %v876
    %v878 = vpop.xlane.xlu0 %877
    %v879 = vsel %vm533, %v392, 0.0
    %880 = vadd.xlane.f32.xlu0 %v879
    %v881 = vpop.xlane.xlu0 %880
    %v882 = vsel %vm533, %v393, 0.0
    %883 = vadd.xlane.f32.xlu0 %v882
    %v884 = vpop.xlane.xlu0 %883
    %v885 = vsel %vm533, %v394, 0.0
    %886 = vadd.xlane.f32.xlu0 %v885
    %v887 = vpop.xlane.xlu0 %886
    %v888 = vsel %vm533, %v395, 0.0
    %889 = vadd.xlane.f32.xlu0 %v888
    %v890 = vpop.xlane.xlu0 %889
    %v891 = vsel %vm533, %v396, 0.0
    %892 = vadd.xlane.f32.xlu0 %v891
    %v893 = vpop.xlane.xlu0 %892
    %v894 = vsel %vm533, %v397, 0.0
    %895 = vadd.xlane.f32.xlu0 %v894
    %v896 = vpop.xlane.xlu0 %895
    %v897 = vsel %vm533, %v398, 0.0
    %898 = vadd.xlane.f32.xlu0 %v897
    %v899 = vpop.xlane.xlu0 %898
    %v900 = vsel %vm533, %v399, 0.0
    %901 = vadd.xlane.f32.xlu0 %v900
    %v902 = vpop.xlane.xlu0 %901
    %v903 = vsel %vm533, %v400, 0.0
    %904 = vadd.xlane.f32.xlu0 %v903
    %v905 = vpop.xlane.xlu0 %904
    %v906 = vsel %vm533, %v401, 0.0
    %907 = vadd.xlane.f32.xlu0 %v906
    %v908 = vpop.xlane.xlu0 %907
    %v909 = vsel %vm533, %v402, 0.0
    %910 = vadd.xlane.f32.xlu0 %v909
    %v911 = vpop.xlane.xlu0 %910
    %v912 = vsel %vm533, %v403, 0.0
    %913 = vadd.xlane.f32.xlu0 %v912
    %v914 = vpop.xlane.xlu0 %913
    %v915 = vsel %vm533, %v404, 0.0
    %916 = vadd.xlane.f32.xlu0 %v915
    %v917 = vpop.xlane.xlu0 %916
    %v918 = vsel %vm533, %v405, 0.0
    %919 = vadd.xlane.f32.xlu0 %v918
    %v920 = vpop.xlane.xlu0 %919
    %v921 = vsel %vm533, %v406, 0.0
    %922 = vadd.xlane.f32.xlu0 %v921
    %v923 = vpop.xlane.xlu0 %922
    %v924 = vsel %vm533, %v407, 0.0
    %925 = vadd.xlane.f32.xlu0 %v924
    %v926 = vpop.xlane.xlu0 %925
    %v927 = vsel %vm533, %v408, 0.0
    %928 = vadd.xlane.f32.xlu0 %v927
    %v929 = vpop.xlane.xlu0 %928
    %v930 = vsel %vm533, %v409, 0.0
    %931 = vadd.xlane.f32.xlu0 %v930
    %v932 = vpop.xlane.xlu0 %931
    %v933 = vsel %vm533, %v410, 0.0
    %934 = vadd.xlane.f32.xlu0 %v933
    %v935 = vpop.xlane.xlu0 %934
    %v936 = vsel %vm533, %v411, 0.0
    %937 = vadd.xlane.f32.xlu0 %v936
    %v938 = vpop.xlane.xlu0 %937
    %v939 = vsel %vm533, %v412, 0.0
    %940 = vadd.xlane.f32.xlu0 %v939
    %v941 = vpop.xlane.xlu0 %940
    %v942 = vsel %vm533, %v413, 0.0
    %943 = vadd.xlane.f32.xlu0 %v942
    %v944 = vpop.xlane.xlu0 %943
    %v945 = vsel %vm533, %v414, 0.0
    %946 = vadd.xlane.f32.xlu0 %v945
    %v947 = vpop.xlane.xlu0 %946
    %v948 = vsel %vm533, %v415, 0.0
    %949 = vadd.xlane.f32.xlu0 %v948
    %v950 = vpop.xlane.xlu0 %949
    %v951 = vsel %vm533, %v416, 0.0
    %952 = vadd.xlane.f32.xlu0 %v951
    %v953 = vpop.xlane.xlu0 %952
    %v954 = vsel %vm533, %v417, 0.0
    %955 = vadd.xlane.f32.xlu0 %v954
    %v956 = vpop.xlane.xlu0 %955
    %v957 = vsel %vm533, %v418, 0.0
    %958 = vadd.xlane.f32.xlu0 %v957
    %v959 = vpop.xlane.xlu0 %958
    %v960 = vsel %vm533, %v419, 0.0
    %961 = vadd.xlane.f32.xlu0 %v960
    %v962 = vpop.xlane.xlu0 %961
    %v963 = vsel %vm533, %v420, 0.0
    %964 = vadd.xlane.f32.xlu0 %v963
    %v965 = vpop.xlane.xlu0 %964
    %v966 = vsel %vm533, %v421, 0.0
    %967 = vadd.xlane.f32.xlu0 %v966
    %v968 = vpop.xlane.xlu0 %967
    %v969 = vsel %vm533, %v422, 0.0
    %970 = vadd.xlane.f32.xlu0 %v969
    %v971 = vpop.xlane.xlu0 %970
    %v972 = vsel %vm533, %v423, 0.0
    %973 = vadd.xlane.f32.xlu0 %v972
    %v974 = vpop.xlane.xlu0 %973
    %v975 = vsel %vm533, %v424, 0.0
    %976 = vadd.xlane.f32.xlu0 %v975
    %v977 = vpop.xlane.xlu0 %976
    %v978 = vsel %vm533, %v425, 0.0
    %979 = vadd.xlane.f32.xlu0 %v978
    %v980 = vpop.xlane.xlu0 %979
    %v981 = vsel %vm533, %v426, 0.0
    %982 = vadd.xlane.f32.xlu0 %v981
    %v983 = vpop.xlane.xlu0 %982
    %v984 = vsel %vm533, %v427, 0.0
    %985 = vadd.xlane.f32.xlu0 %v984
    %v986 = vpop.xlane.xlu0 %985
    %v987 = vsel %vm533, %v428, 0.0
    %988 = vadd.xlane.f32.xlu0 %v987
    %v989 = vpop.xlane.xlu0 %988
    %v990 = vsel %vm533, %v429, 0.0
    %991 = vadd.xlane.f32.xlu0 %v990
    %v992 = vpop.xlane.xlu0 %991
    %v993 = vsel %vm533, %v430, 0.0
    %994 = vadd.xlane.f32.xlu0 %v993
    %v995 = vpop.xlane.xlu0 %994
    %v996 = vsel %vm533, %v431, 0.0
    %997 = vadd.xlane.f32.xlu0 %v996
    %v998 = vpop.xlane.xlu0 %997
    %v999 = vsel %vm533, %v432, 0.0
    %1000 = vadd.xlane.f32.xlu0 %v999
    %v1001 = vpop.xlane.xlu0 %1000
    %v1002 = vsel %vm533, %v433, 0.0
    %1003 = vadd.xlane.f32.xlu0 %v1002
    %v1004 = vpop.xlane.xlu0 %1003
    %v1005 = vsel %vm533, %v434, 0.0
    %1006 = vadd.xlane.f32.xlu0 %v1005
    %v1007 = vpop.xlane.xlu0 %1006
    %v1008 = vsel %vm533, %v435, 0.0
    %1009 = vadd.xlane.f32.xlu0 %v1008
    %v1010 = vpop.xlane.xlu0 %1009
    %v1011 = vsel %vm533, %v436, 0.0
    %1012 = vadd.xlane.f32.xlu0 %v1011
    %v1013 = vpop.xlane.xlu0 %1012
    %v1014 = vsel %vm533, %v437, 0.0
    %1015 = vadd.xlane.f32.xlu0 %v1014
    %v1016 = vpop.xlane.xlu0 %1015
    %v1017 = vsel %vm533, %v438, 0.0
    %1018 = vadd.xlane.f32.xlu0 %v1017
    %v1019 = vpop.xlane.xlu0 %1018
    %v1020 = vsel %vm533, %v439, 0.0
    %1021 = vadd.xlane.f32.xlu0 %v1020
    %v1022 = vpop.xlane.xlu0 %1021
    %v1023 = vsel %vm533, %v440, 0.0
    %1024 = vadd.xlane.f32.xlu0 %v1023
    %v1025 = vpop.xlane.xlu0 %1024
    %v1026 = vsel %vm533, %v441, 0.0
    %1027 = vadd.xlane.f32.xlu0 %v1026
    %v1028 = vpop.xlane.xlu0 %1027
    %v1029 = vsel %vm533, %v442, 0.0
    %1030 = vadd.xlane.f32.xlu0 %v1029
    %v1031 = vpop.xlane.xlu0 %1030
    %v1032 = vsel %vm533, %v443, 0.0
    %1033 = vadd.xlane.f32.xlu0 %v1032
    %v1034 = vpop.xlane.xlu0 %1033
    %v1035 = vsel %vm533, %v444, 0.0
    %1036 = vadd.xlane.f32.xlu0 %v1035
    %v1037 = vpop.xlane.xlu0 %1036
    %v1038 = vsel %vm533, %v445, 0.0
    %1039 = vadd.xlane.f32.xlu0 %v1038
    %v1040 = vpop.xlane.xlu0 %1039
    %v1041 = vsel %vm533, %v446, 0.0
    %1042 = vadd.xlane.f32.xlu0 %v1041
    %v1043 = vpop.xlane.xlu0 %1042
    %v1044 = vsel %vm533, %v447, 0.0
    %1045 = vadd.xlane.f32.xlu0 %v1044
    %v1046 = vpop.xlane.xlu0 %1045
    %v1047 = vsel %vm533, %v448, 0.0
    %1048 = vadd.xlane.f32.xlu0 %v1047
    %v1049 = vpop.xlane.xlu0 %1048
    %v1050 = vsel %vm533, %v449, 0.0
    %1051 = vadd.xlane.f32.xlu0 %v1050
    %v1052 = vpop.xlane.xlu0 %1051
    %v1053 = vsel %vm533, %v450, 0.0
    %1054 = vadd.xlane.f32.xlu0 %v1053
    %v1055 = vpop.xlane.xlu0 %1054
    %v1056 = vsel %vm533, %v451, 0.0
    %1057 = vadd.xlane.f32.xlu0 %v1056
    %v1058 = vpop.xlane.xlu0 %1057
    %v1059 = vsel %vm533, %v452, 0.0
    %1060 = vadd.xlane.f32.xlu0 %v1059
    %v1061 = vpop.xlane.xlu0 %1060
    %v1062 = vsel %vm533, %v453, 0.0
    %1063 = vadd.xlane.f32.xlu0 %v1062
    %v1064 = vpop.xlane.xlu0 %1063
    %v1065 = vsel %vm533, %v454, 0.0
    %1066 = vadd.xlane.f32.xlu0 %v1065
    %v1067 = vpop.xlane.xlu0 %1066
    %v1068 = vsel %vm533, %v455, 0.0
    %1069 = vadd.xlane.f32.xlu0 %v1068
    %v1070 = vpop.xlane.xlu0 %1069
    %v1071 = vsel %vm533, %v456, 0.0
    %1072 = vadd.xlane.f32.xlu0 %v1071
    %v1073 = vpop.xlane.xlu0 %1072
    %v1074 = vsel %vm533, %v457, 0.0
    %1075 = vadd.xlane.f32.xlu0 %v1074
    %v1076 = vpop.xlane.xlu0 %1075
    %v1077 = vsel %vm533, %v458, 0.0
    %1078 = vadd.xlane.f32.xlu0 %v1077
    %v1079 = vpop.xlane.xlu0 %1078
    %v1080 = vsel %vm533, %v459, 0.0
    %1081 = vadd.xlane.f32.xlu0 %v1080
    %v1082 = vpop.xlane.xlu0 %1081
    %v1083 = vsel %vm533, %v460, 0.0
    %1084 = vadd.xlane.f32.xlu0 %v1083
    %v1085 = vpop.xlane.xlu0 %1084
    %v1086 = vsel %vm533, %v461, 0.0
    %1087 = vadd.xlane.f32.xlu0 %v1086
    %v1088 = vpop.xlane.xlu0 %1087
    %v1089 = vsel %vm533, %v462, 0.0
    %1090 = vadd.xlane.f32.xlu0 %v1089
    %v1091 = vpop.xlane.xlu0 %1090
    %v1092 = vsel %vm533, %v463, 0.0
    %1093 = vadd.xlane.f32.xlu0 %v1092
    %v1094 = vpop.xlane.xlu0 %1093
    %v1095 = vsel %vm533, %v464, 0.0
    %1096 = vadd.xlane.f32.xlu0 %v1095
    %v1097 = vpop.xlane.xlu0 %1096
    %v1098 = vsel %vm533, %v465, 0.0
    %1099 = vadd.xlane.f32.xlu0 %v1098
    %v1100 = vpop.xlane.xlu0 %1099
    %v1101 = vsel %vm533, %v466, 0.0
    %1102 = vadd.xlane.f32.xlu0 %v1101
    %v1103 = vpop.xlane.xlu0 %1102
    %v1104 = vsel %vm533, %v467, 0.0
    %1105 = vadd.xlane.f32.xlu0 %v1104
    %v1106 = vpop.xlane.xlu0 %1105
    %v1107 = vsel %vm533, %v468, 0.0
    %1108 = vadd.xlane.f32.xlu0 %v1107
    %v1109 = vpop.xlane.xlu0 %1108
    %v1110 = vsel %vm533, %v469, 0.0
    %1111 = vadd.xlane.f32.xlu0 %v1110
    %v1112 = vpop.xlane.xlu0 %1111
    %v1113 = vsel %vm533, %v470, 0.0
    %1114 = vadd.xlane.f32.xlu0 %v1113
    %v1115 = vpop.xlane.xlu0 %1114
    %v1116 = vsel %vm533, %v471, 0.0
    %1117 = vadd.xlane.f32.xlu0 %v1116
    %v1118 = vpop.xlane.xlu0 %1117
    %v1119 = vsel %vm533, %v472, 0.0
    %1120 = vadd.xlane.f32.xlu0 %v1119
    %v1121 = vpop.xlane.xlu0 %1120
    %v1122 = vsel %vm533, %v473, 0.0
    %1123 = vadd.xlane.f32.xlu0 %v1122
    %v1124 = vpop.xlane.xlu0 %1123
    %v1125 = vsel %vm533, %v474, 0.0
    %1126 = vadd.xlane.f32.xlu0 %v1125
    %v1127 = vpop.xlane.xlu0 %1126
    %v1128 = vsel %vm533, %v475, 0.0
    %1129 = vadd.xlane.f32.xlu0 %v1128
    %v1130 = vpop.xlane.xlu0 %1129
    %v1131 = vsel %vm533, %v476, 0.0
    %1132 = vadd.xlane.f32.xlu0 %v1131
    %v1133 = vpop.xlane.xlu0 %1132
    %v1134 = vsel %vm533, %v477, 0.0
    %1135 = vadd.xlane.f32.xlu0 %v1134
    %v1136 = vpop.xlane.xlu0 %1135
    %v1137 = vsel %vm533, %v478, 0.0
    %1138 = vadd.xlane.f32.xlu0 %v1137
    %v1139 = vpop.xlane.xlu0 %1138
    %v1140 = vsel %vm533, %v479, 0.0
    %1141 = vadd.xlane.f32.xlu0 %v1140
    %v1142 = vpop.xlane.xlu0 %1141
    %v1143 = vsel %vm533, %v480, 0.0
    %1144 = vadd.xlane.f32.xlu0 %v1143
    %v1145 = vpop.xlane.xlu0 %1144
    %v1146 = vsel %vm533, %v481, 0.0
    %1147 = vadd.xlane.f32.xlu0 %v1146
    %v1148 = vpop.xlane.xlu0 %1147
    %v1149 = vsel %vm533, %v482, 0.0
    %1150 = vadd.xlane.f32.xlu0 %v1149
    %v1151 = vpop.xlane.xlu0 %1150
    %v1152 = vsel %vm533, %v483, 0.0
    %1153 = vadd.xlane.f32.xlu0 %v1152
    %v1154 = vpop.xlane.xlu0 %1153
    %v1155 = vsel %vm533, %v484, 0.0
    %1156 = vadd.xlane.f32.xlu0 %v1155
    %v1157 = vpop.xlane.xlu0 %1156
    %v1158 = vsel %vm533, %v485, 0.0
    %1159 = vadd.xlane.f32.xlu0 %v1158
    %v1160 = vpop.xlane.xlu0 %1159
    %v1161 = vsel %vm533, %v486, 0.0
    %1162 = vadd.xlane.f32.xlu0 %v1161
    %v1163 = vpop.xlane.xlu0 %1162
    %v1164 = vsel %vm533, %v487, 0.0
    %1165 = vadd.xlane.f32.xlu0 %v1164
    %v1166 = vpop.xlane.xlu0 %1165
    %v1167 = vsel %vm533, %v488, 0.0
    %1168 = vadd.xlane.f32.xlu0 %v1167
    %v1169 = vpop.xlane.xlu0 %1168
    %v1170 = vsel %vm533, %v489, 0.0
    %1171 = vadd.xlane.f32.xlu0 %v1170
    %v1172 = vpop.xlane.xlu0 %1171
    %v1173 = vsel %vm533, %v490, 0.0
    %1174 = vadd.xlane.f32.xlu0 %v1173
    %v1175 = vpop.xlane.xlu0 %1174
    %v1176 = vsel %vm533, %v491, 0.0
    %1177 = vadd.xlane.f32.xlu0 %v1176
    %v1178 = vpop.xlane.xlu0 %1177
    %v1179 = vsel %vm533, %v492, 0.0
    %1180 = vadd.xlane.f32.xlu0 %v1179
    %v1181 = vpop.xlane.xlu0 %1180
    %v1182 = vsel %vm533, %v493, 0.0
    %1183 = vadd.xlane.f32.xlu0 %v1182
    %v1184 = vpop.xlane.xlu0 %1183
    %v1185 = vsel %vm533, %v494, 0.0
    %1186 = vadd.xlane.f32.xlu0 %v1185
    %v1187 = vpop.xlane.xlu0 %1186
    %v1188 = vsel %vm533, %v495, 0.0
    %1189 = vadd.xlane.f32.xlu0 %v1188
    %v1190 = vpop.xlane.xlu0 %1189
    %v1191 = vsel %vm533, %v496, 0.0
    %1192 = vadd.xlane.f32.xlu0 %v1191
    %v1193 = vpop.xlane.xlu0 %1192
    %v1194 = vsel %vm533, %v497, 0.0
    %1195 = vadd.xlane.f32.xlu0 %v1194
    %v1196 = vpop.xlane.xlu0 %1195
    %v1197 = vsel %vm533, %v498, 0.0
    %1198 = vadd.xlane.f32.xlu0 %v1197
    %v1199 = vpop.xlane.xlu0 %1198
    %v1200 = vsel %vm533, %v499, 0.0
    %1201 = vadd.xlane.f32.xlu0 %v1200
    %v1202 = vpop.xlane.xlu0 %1201
    %v1203 = vsel %vm533, %v500, 0.0
    %1204 = vadd.xlane.f32.xlu0 %v1203
    %v1205 = vpop.xlane.xlu0 %1204
    %v1206 = vsel %vm533, %v501, 0.0
    %1207 = vadd.xlane.f32.xlu0 %v1206
    %v1208 = vpop.xlane.xlu0 %1207
    %v1209 = vsel %vm533, %v502, 0.0
    %1210 = vadd.xlane.f32.xlu0 %v1209
    %v1211 = vpop.xlane.xlu0 %1210
    %v1212 = vsel %vm533, %v503, 0.0
    %1213 = vadd.xlane.f32.xlu0 %v1212
    %v1214 = vpop.xlane.xlu0 %1213
    %v1215 = vsel %vm533, %v504, 0.0
    %1216 = vadd.xlane.f32.xlu0 %v1215
    %v1217 = vpop.xlane.xlu0 %1216
    %v1218 = vsel %vm533, %v505, 0.0
    %1219 = vadd.xlane.f32.xlu0 %v1218
    %v1220 = vpop.xlane.xlu0 %1219
    %v1221 = vsel %vm533, %v506, 0.0
    %1222 = vadd.xlane.f32.xlu0 %v1221
    %v1223 = vpop.xlane.xlu0 %1222
    %v1224 = vsel %vm533, %v507, 0.0
    %1225 = vadd.xlane.f32.xlu0 %v1224
    %v1226 = vpop.xlane.xlu0 %1225
    %v1227 = vsel %vm533, %v508, 0.0
    %1228 = vadd.xlane.f32.xlu0 %v1227
    %v1229 = vpop.xlane.xlu0 %1228
    %v1230 = vsel %vm533, %v509, 0.0
    %1231 = vadd.xlane.f32.xlu0 %v1230
    %v1232 = vpop.xlane.xlu0 %1231
    %v1233 = vsel %vm533, %v510, 0.0
    %1234 = vadd.xlane.f32.xlu0 %v1233
    %v1235 = vpop.xlane.xlu0 %1234
    %v1236 = vsel %vm533, %v511, 0.0
    %1237 = vadd.xlane.f32.xlu0 %v1236
    %v1238 = vpop.xlane.xlu0 %1237
    %v1239 = vsel %vm533, %v512, 0.0
    %1240 = vadd.xlane.f32.xlu0 %v1239
    %v1241 = vpop.xlane.xlu0 %1240
    %v1242 = vsel %vm533, %v513, 0.0
    %1243 = vadd.xlane.f32.xlu0 %v1242
    %v1244 = vpop.xlane.xlu0 %1243
    %v1245 = vsel %vm533, %v514, 0.0
    %1246 = vadd.xlane.f32.xlu0 %v1245
    %v1247 = vpop.xlane.xlu0 %1246
    %v1248 = vsel %vm533, %v515, 0.0
    %1249 = vadd.xlane.f32.xlu0 %v1248
    %v1250 = vpop.xlane.xlu0 %1249
    %v1251 = vsel %vm533, %v516, 0.0
    %1252 = vadd.xlane.f32.xlu0 %v1251
    %v1253 = vpop.xlane.xlu0 %1252
    %v1254 = vsel %vm533, %v517, 0.0
    %1255 = vadd.xlane.f32.xlu0 %v1254
    %v1256 = vpop.xlane.xlu0 %1255
    %v1257 = vsel %vm533, %v518, 0.0
    %1258 = vadd.xlane.f32.xlu0 %v1257
    %v1259 = vpop.xlane.xlu0 %1258
    %v1260 = vsel %vm533, %v519, 0.0
    %1261 = vadd.xlane.f32.xlu0 %v1260
    %v1262 = vpop.xlane.xlu0 %1261
    %v1263 = vsel %vm533, %v520, 0.0
    %1264 = vadd.xlane.f32.xlu0 %v1263
    %v1265 = vpop.xlane.xlu0 %1264
    %v1266 = vsel %vm533, %v521, 0.0
    %1267 = vadd.xlane.f32.xlu0 %v1266
    %v1268 = vpop.xlane.xlu0 %1267
    %v1269 = vsel %vm533, %v522, 0.0
    %1270 = vadd.xlane.f32.xlu0 %v1269
    %v1271 = vpop.xlane.xlu0 %1270
    %v1272 = vsel %vm533, %v523, 0.0
    %1273 = vadd.xlane.f32.xlu0 %v1272
    %v1274 = vpop.xlane.xlu0 %1273
    %v1275 = vsel %vm533, %v524, 0.0
    %1276 = vadd.xlane.f32.xlu0 %v1275
    %v1277 = vpop.xlane.xlu0 %1276
    %v1278 = vsel %vm533, %v525, 0.0
    %1279 = vadd.xlane.f32.xlu0 %v1278
    %v1280 = vpop.xlane.xlu0 %1279
    %v1281 = vsel %vm533, %v526, 0.0
    %1282 = vadd.xlane.f32.xlu0 %v1281
    %v1283 = vpop.xlane.xlu0 %1282
    %v1284 = vsel %vm533, %v527, 0.0
    %1285 = vadd.xlane.f32.xlu0 %v1284
    %v1286 = vpop.xlane.xlu0 %1285
    %v1287 = vsel %vm533, %v528, 0.0
    %1288 = vadd.xlane.f32.xlu0 %v1287
    %v1289 = vpop.xlane.xlu0 %1288
    %v1290 = vsel %vm533, %v529, 0.0
    %1291 = vadd.xlane.f32.xlu0 %v1290
    %v1292 = vpop.xlane.xlu0 %1291
    %v1293 = vsel %vm533, %v530, 0.0
    %1294 = vadd.xlane.f32.xlu0 %v1293
    %v1295 = vpop.xlane.xlu0 %1294
    %v1296 = vsel %vm533, %v531, 0.0
    %1297 = vadd.xlane.f32.xlu0 %v1296
    %v1298 = vpop.xlane.xlu0 %1297
    %v1299 = vsel %vm533, %v532, 0.0
    %1300 = vadd.xlane.f32.xlu0 %v1299
    %v1301 = vpop.xlane.xlu0 %1300
    %v1302 = vld [vmem:[#allocation2] sm:$0x3]
    %v1303 = vld [vmem:[%s1] sm:$0xf]
    %v1304 = vld [vmem:[%s1 + $0x4] sm:$0xf]
    %v1305 = vld [vmem:[%s1 + $0x8] sm:$0xf]
    %v1306 = vld [vmem:[%s1 + $0xc] sm:$0xf]
    %v1307 = vld [vmem:[%s1 + $0x10] sm:$0xf]
    %v1308 = vld [vmem:[%s1 + $0x14] sm:$0xf]
    %v1309 = vld [vmem:[%s1 + $0x18] sm:$0xf]
    %v1310 = vld [vmem:[%s1 + $0x1c] sm:$0xf]
    %v1311 = vld [vmem:[%s1 + $0x20] sm:$0xf]
    %v1312 = vld [vmem:[%s1 + $0x24] sm:$0xf]
    %v1313 = vld [vmem:[%s1 + $0x28] sm:$0xf]
    %v1314 = vld [vmem:[%s1 + $0x2c] sm:$0xf]
    %v1315 = vld [vmem:[%s1 + $0x30] sm:$0xf]
    %v1316 = vld [vmem:[%s1 + $0x34] sm:$0xf]
    %v1317 = vld [vmem:[%s1 + $0x38] sm:$0xf]
    %v1318 = vld [vmem:[%s1 + $0x3c] sm:$0xf]
    %v1319 = vld [vmem:[%s1 + $0x40] sm:$0xf]
    %v1320 = vld [vmem:[%s1 + $0x44] sm:$0xf]
    %v1321 = vld [vmem:[%s1 + $0x48] sm:$0xf]
    %v1322 = vld [vmem:[%s1 + $0x4c] sm:$0xf]
    %v1323 = vld [vmem:[%s1 + $0x50] sm:$0xf]
    %v1324 = vld [vmem:[%s1 + $0x54] sm:$0xf]
    %v1325 = vld [vmem:[%s1 + $0x58] sm:$0xf]
    %v1326 = vld [vmem:[%s1 + $0x5c] sm:$0xf]
    %v1327 = vld [vmem:[%s1 + $0x60] sm:$0xf]
    %v1328 = vld [vmem:[%s1 + $0x64] sm:$0xf]
    %v1329 = vld [vmem:[%s1 + $0x68] sm:$0xf]
    %v1330 = vld [vmem:[%s1 + $0x6c] sm:$0xf]
    %v1331 = vld [vmem:[%s1 + $0x70] sm:$0xf]
    %v1332 = vld [vmem:[%s1 + $0x74] sm:$0xf]
    %v1333 = vld [vmem:[%s1 + $0x78] sm:$0xf]
    %v1334 = vld [vmem:[%s1 + $0x7c] sm:$0xf]
    %v1335 = vld [vmem:[%s1 + $0x80] sm:$0xf]
    %v1336 = vld [vmem:[%s1 + $0x84] sm:$0xf]
    %v1337 = vld [vmem:[%s1 + $0x88] sm:$0xf]
    %v1338 = vld [vmem:[%s1 + $0x8c] sm:$0xf]
    %v1339 = vld [vmem:[%s1 + $0x90] sm:$0xf]
    %v1340 = vld [vmem:[%s1 + $0x94] sm:$0xf]
    %v1341 = vld [vmem:[%s1 + $0x98] sm:$0xf]
    %v1342 = vld [vmem:[%s1 + $0x9c] sm:$0xf]
    %v1343 = vld [vmem:[%s1 + $0xa0] sm:$0xf]
    %v1344 = vld [vmem:[%s1 + $0xa4] sm:$0xf]
    %v1345 = vld [vmem:[%s1 + $0xa8] sm:$0xf]
    %v1346 = vld [vmem:[%s1 + $0xac] sm:$0xf]
    %v1347 = vld [vmem:[%s1 + $0xb0] sm:$0xf]
    %v1348 = vld [vmem:[%s1 + $0xb4] sm:$0xf]
    %v1349 = vld [vmem:[%s1 + $0xb8] sm:$0xf]
    %v1350 = vld [vmem:[%s1 + $0xbc] sm:$0xf]
    %v1351 = vld [vmem:[%s1 + $0xc0] sm:$0xf]
    %v1352 = vld [vmem:[%s1 + $0xc4] sm:$0xf]
    %v1353 = vld [vmem:[%s1 + $0xc8] sm:$0xf]
    %v1354 = vld [vmem:[%s1 + $0xcc] sm:$0xf]
    %v1355 = vld [vmem:[%s1 + $0xd0] sm:$0xf]
    %v1356 = vld [vmem:[%s1 + $0xd4] sm:$0xf]
    %v1357 = vld [vmem:[%s1 + $0xd8] sm:$0xf]
    %v1358 = vld [vmem:[%s1 + $0xdc] sm:$0xf]
    %v1359 = vld [vmem:[%s1 + $0xe0] sm:$0xf]
    %v1360 = vld [vmem:[%s1 + $0xe4] sm:$0xf]
    %v1361 = vld [vmem:[%s1 + $0xe8] sm:$0xf]
    %v1362 = vld [vmem:[%s1 + $0xec] sm:$0xf]
    %v1363 = vld [vmem:[%s1 + $0xf0] sm:$0xf]
    %v1364 = vld [vmem:[%s1 + $0xf4] sm:$0xf]
    %v1365 = vld [vmem:[%s1 + $0xf8] sm:$0xf]
    %v1366 = vld [vmem:[%s1 + $0xfc] sm:$0xf]
    %v1367 = vld [vmem:[%s1 + $0x100] sm:$0xf]
    %v1368 = vld [vmem:[%s1 + $0x104] sm:$0xf]
    %v1369 = vld [vmem:[%s1 + $0x108] sm:$0xf]
    %v1370 = vld [vmem:[%s1 + $0x10c] sm:$0xf]
    %v1371 = vld [vmem:[%s1 + $0x110] sm:$0xf]
    %v1372 = vld [vmem:[%s1 + $0x114] sm:$0xf]
    %v1373 = vld [vmem:[%s1 + $0x118] sm:$0xf]
    %v1374 = vld [vmem:[%s1 + $0x11c] sm:$0xf]
    %v1375 = vld [vmem:[%s1 + $0x120] sm:$0xf]
    %v1376 = vld [vmem:[%s1 + $0x124] sm:$0xf]
    %v1377 = vld [vmem:[%s1 + $0x128] sm:$0xf]
    %v1378 = vld [vmem:[%s1 + $0x12c] sm:$0xf]
    %v1379 = vld [vmem:[%s1 + $0x130] sm:$0xf]
    %v1380 = vld [vmem:[%s1 + $0x134] sm:$0xf]
    %v1381 = vld [vmem:[%s1 + $0x138] sm:$0xf]
    %v1382 = vld [vmem:[%s1 + $0x13c] sm:$0xf]
    %v1383 = vld [vmem:[%s1 + $0x140] sm:$0xf]
    %v1384 = vld [vmem:[%s1 + $0x144] sm:$0xf]
    %v1385 = vld [vmem:[%s1 + $0x148] sm:$0xf]
    %v1386 = vld [vmem:[%s1 + $0x14c] sm:$0xf]
    %v1387 = vld [vmem:[%s1 + $0x150] sm:$0xf]
    %v1388 = vld [vmem:[%s1 + $0x154] sm:$0xf]
    %v1389 = vld [vmem:[%s1 + $0x158] sm:$0xf]
    %v1390 = vld [vmem:[%s1 + $0x15c] sm:$0xf]
    %v1391 = vld [vmem:[%s1 + $0x160] sm:$0xf]
    %v1392 = vld [vmem:[%s1 + $0x164] sm:$0xf]
    %v1393 = vld [vmem:[%s1 + $0x168] sm:$0xf]
    %v1394 = vld [vmem:[%s1 + $0x16c] sm:$0xf]
    %v1395 = vld [vmem:[%s1 + $0x170] sm:$0xf]
    %v1396 = vld [vmem:[%s1 + $0x174] sm:$0xf]
    %v1397 = vld [vmem:[%s1 + $0x178] sm:$0xf]
    %v1398 = vld [vmem:[%s1 + $0x17c] sm:$0xf]
    %v1399 = vld [vmem:[%s1 + $0x180] sm:$0xf]
    %v1400 = vld [vmem:[%s1 + $0x184] sm:$0xf]
    %v1401 = vld [vmem:[%s1 + $0x188] sm:$0xf]
    %v1402 = vld [vmem:[%s1 + $0x18c] sm:$0xf]
    %v1403 = vld [vmem:[%s1 + $0x190] sm:$0xf]
    %v1404 = vld [vmem:[%s1 + $0x194] sm:$0xf]
    %v1405 = vld [vmem:[%s1 + $0x198] sm:$0xf]
    %v1406 = vld [vmem:[%s1 + $0x19c] sm:$0xf]
    %v1407 = vld [vmem:[%s1 + $0x1a0] sm:$0xf]
    %v1408 = vld [vmem:[%s1 + $0x1a4] sm:$0xf]
    %v1409 = vld [vmem:[%s1 + $0x1a8] sm:$0xf]
    %v1410 = vld [vmem:[%s1 + $0x1ac] sm:$0xf]
    %v1411 = vld [vmem:[%s1 + $0x1b0] sm:$0xf]
    %v1412 = vld [vmem:[%s1 + $0x1b4] sm:$0xf]
    %v1413 = vld [vmem:[%s1 + $0x1b8] sm:$0xf]
    %v1414 = vld [vmem:[%s1 + $0x1bc] sm:$0xf]
    %v1415 = vld [vmem:[%s1 + $0x1c0] sm:$0xf]
    %v1416 = vld [vmem:[%s1 + $0x1c4] sm:$0xf]
    %v1417 = vld [vmem:[%s1 + $0x1c8] sm:$0xf]
    %v1418 = vld [vmem:[%s1 + $0x1cc] sm:$0xf]
    %v1419 = vld [vmem:[%s1 + $0x1d0] sm:$0xf]
    %v1420 = vld [vmem:[%s1 + $0x1d4] sm:$0xf]
    %v1421 = vld [vmem:[%s1 + $0x1d8] sm:$0xf]
    %v1422 = vld [vmem:[%s1 + $0x1dc] sm:$0xf]
    %v1423 = vld [vmem:[%s1 + $0x1e0] sm:$0xf]
    %v1424 = vld [vmem:[%s1 + $0x1e4] sm:$0xf]
    %v1425 = vld [vmem:[%s1 + $0x1e8] sm:$0xf]
    %v1426 = vld [vmem:[%s1 + $0x1ec] sm:$0xf]
    %v1427 = vld [vmem:[%s1 + $0x1f0] sm:$0xf]
    %v1428 = vld [vmem:[%s1 + $0x1f4] sm:$0xf]
    %v1429 = vld [vmem:[%s1 + $0x1f8] sm:$0xf]
    %v1430 = vld [vmem:[%s1 + $0x1fc] sm:$0xf]
    %v1431 = vunpack.c.l.bf16 %v1303
    %v1432 = vunpack.c.l.bf16 %v1304
    %v1433 = vunpack.c.l.bf16 %v1305
    %v1434 = vunpack.c.l.bf16 %v1306
    %v1435 = vunpack.c.l.bf16 %v1307
    %v1436 = vunpack.c.l.bf16 %v1308
    %v1437 = vunpack.c.l.bf16 %v1309
    %v1438 = vunpack.c.l.bf16 %v1310
    %v1439 = vunpack.c.l.bf16 %v1311
    %v1440 = vunpack.c.l.bf16 %v1312
    %v1441 = vunpack.c.l.bf16 %v1313
    %v1442 = vunpack.c.l.bf16 %v1314
    %v1443 = vunpack.c.l.bf16 %v1315
    %v1444 = vunpack.c.l.bf16 %v1316
    %v1445 = vunpack.c.l.bf16 %v1317
    %v1446 = vunpack.c.l.bf16 %v1318
    %v1447 = vunpack.c.l.bf16 %v1319
    %v1448 = vunpack.c.l.bf16 %v1320
    %v1449 = vunpack.c.l.bf16 %v1321
    %v1450 = vunpack.c.l.bf16 %v1322
    %v1451 = vunpack.c.l.bf16 %v1323
    %v1452 = vunpack.c.l.bf16 %v1324
    %v1453 = vunpack.c.l.bf16 %v1325
    %v1454 = vunpack.c.l.bf16 %v1326
    %v1455 = vunpack.c.l.bf16 %v1327
    %v1456 = vunpack.c.l.bf16 %v1328
    %v1457 = vunpack.c.l.bf16 %v1329
    %v1458 = vunpack.c.l.bf16 %v1330
    %v1459 = vunpack.c.l.bf16 %v1331
    %v1460 = vunpack.c.l.bf16 %v1332
    %v1461 = vunpack.c.l.bf16 %v1333
    %v1462 = vunpack.c.l.bf16 %v1334
    %v1463 = vunpack.c.l.bf16 %v1335
    %v1464 = vunpack.c.l.bf16 %v1336
    %v1465 = vunpack.c.l.bf16 %v1337
    %v1466 = vunpack.c.l.bf16 %v1338
    %v1467 = vunpack.c.l.bf16 %v1339
    %v1468 = vunpack.c.l.bf16 %v1340
    %v1469 = vunpack.c.l.bf16 %v1341
    %v1470 = vunpack.c.l.bf16 %v1342
    %v1471 = vunpack.c.l.bf16 %v1343
    %v1472 = vunpack.c.l.bf16 %v1344
    %v1473 = vunpack.c.l.bf16 %v1345
    %v1474 = vunpack.c.l.bf16 %v1346
    %v1475 = vunpack.c.l.bf16 %v1347
    %v1476 = vunpack.c.l.bf16 %v1348
    %v1477 = vunpack.c.l.bf16 %v1349
    %v1478 = vunpack.c.l.bf16 %v1350
    %v1479 = vunpack.c.l.bf16 %v1351
    %v1480 = vunpack.c.l.bf16 %v1352
    %v1481 = vunpack.c.l.bf16 %v1353
    %v1482 = vunpack.c.l.bf16 %v1354
    %v1483 = vunpack.c.l.bf16 %v1355
    %v1484 = vunpack.c.l.bf16 %v1356
    %v1485 = vunpack.c.l.bf16 %v1357
    %v1486 = vunpack.c.l.bf16 %v1358
    %v1487 = vunpack.c.l.bf16 %v1359
    %v1488 = vunpack.c.l.bf16 %v1360
    %v1489 = vunpack.c.l.bf16 %v1361
    %v1490 = vunpack.c.l.bf16 %v1362
    %v1491 = vunpack.c.l.bf16 %v1363
    %v1492 = vunpack.c.l.bf16 %v1364
    %v1493 = vunpack.c.l.bf16 %v1365
    %v1494 = vunpack.c.l.bf16 %v1366
    %v1495 = vunpack.c.l.bf16 %v1367
    %v1496 = vunpack.c.l.bf16 %v1368
    %v1497 = vunpack.c.l.bf16 %v1369
    %v1498 = vunpack.c.l.bf16 %v1370
    %v1499 = vunpack.c.l.bf16 %v1371
    %v1500 = vunpack.c.l.bf16 %v1372
    %v1501 = vunpack.c.l.bf16 %v1373
    %v1502 = vunpack.c.l.bf16 %v1374
    %v1503 = vunpack.c.l.bf16 %v1375
    %v1504 = vunpack.c.l.bf16 %v1376
    %v1505 = vunpack.c.l.bf16 %v1377
    %v1506 = vunpack.c.l.bf16 %v1378
    %v1507 = vunpack.c.l.bf16 %v1379
    %v1508 = vunpack.c.l.bf16 %v1380
    %v1509 = vunpack.c.l.bf16 %v1381
    %v1510 = vunpack.c.l.bf16 %v1382
    %v1511 = vunpack.c.l.bf16 %v1383
    %v1512 = vunpack.c.l.bf16 %v1384
    %v1513 = vunpack.c.l.bf16 %v1385
    %v1514 = vunpack.c.l.bf16 %v1386
    %v1515 = vunpack.c.l.bf16 %v1387
    %v1516 = vunpack.c.l.bf16 %v1388
    %v1517 = vunpack.c.l.bf16 %v1389
    %v1518 = vunpack.c.l.bf16 %v1390
    %v1519 = vunpack.c.l.bf16 %v1391
    %v1520 = vunpack.c.l.bf16 %v1392
    %v1521 = vunpack.c.l.bf16 %v1393
    %v1522 = vunpack.c.l.bf16 %v1394
    %v1523 = vunpack.c.l.bf16 %v1395
    %v1524 = vunpack.c.l.bf16 %v1396
    %v1525 = vunpack.c.l.bf16 %v1397
    %v1526 = vunpack.c.l.bf16 %v1398
    %v1527 = vunpack.c.l.bf16 %v1399
    %v1528 = vunpack.c.l.bf16 %v1400
    %v1529 = vunpack.c.l.bf16 %v1401
    %v1530 = vunpack.c.l.bf16 %v1402
    %v1531 = vunpack.c.l.bf16 %v1403
    %v1532 = vunpack.c.l.bf16 %v1404
    %v1533 = vunpack.c.l.bf16 %v1405
    %v1534 = vunpack.c.l.bf16 %v1406
    %v1535 = vunpack.c.l.bf16 %v1407
    %v1536 = vunpack.c.l.bf16 %v1408
    %v1537 = vunpack.c.l.bf16 %v1409
    %v1538 = vunpack.c.l.bf16 %v1410
    %v1539 = vunpack.c.l.bf16 %v1411
    %v1540 = vunpack.c.l.bf16 %v1412
    %v1541 = vunpack.c.l.bf16 %v1413
    %v1542 = vunpack.c.l.bf16 %v1414
    %v1543 = vunpack.c.l.bf16 %v1415
    %v1544 = vunpack.c.l.bf16 %v1416
    %v1545 = vunpack.c.l.bf16 %v1417
    %v1546 = vunpack.c.l.bf16 %v1418
    %v1547 = vunpack.c.l.bf16 %v1419
    %v1548 = vunpack.c.l.bf16 %v1420
    %v1549 = vunpack.c.l.bf16 %v1421
    %v1550 = vunpack.c.l.bf16 %v1422
    %v1551 = vunpack.c.l.bf16 %v1423
    %v1552 = vunpack.c.l.bf16 %v1424
    %v1553 = vunpack.c.l.bf16 %v1425
    %v1554 = vunpack.c.l.bf16 %v1426
    %v1555 = vunpack.c.l.bf16 %v1427
    %v1556 = vunpack.c.l.bf16 %v1428
    %v1557 = vunpack.c.l.bf16 %v1429
    %v1558 = vunpack.c.l.bf16 %v1430
    %v1815 = vlaneseq
    %v1816 = vand.u32 %v1815, 127
    %v1817 = vperm.slane %v536, %v1816
    %v1818 = vadd.s32 %v1816, 4294967288
    %v1819 = vperm.slane %v539, %v1818
    %vm1820 = vcmask 130112
    %v1821 = vsel %vm1820, %v1819, %v1817
    %v1822 = vadd.s32 %v1816, 4294967280
    %v1823 = vperm.slane %v542, %v1822
    %vm1824 = vcmask 195712
    %v1825 = vsel %vm1824, %v1823, %v1821
    %v1826 = vadd.s32 %v1816, 4294967272
    %v1827 = vperm.slane %v545, %v1826
    %vm1828 = vcmask 261312
    %v1829 = vsel %vm1828, %v1827, %v1825
    %v1830 = vadd.s32 %v1816, 4294967264
    %v1831 = vperm.slane %v548, %v1830
    %vm1832 = vcmask 326912
    %v1833 = vsel %vm1832, %v1831, %v1829
    %v1834 = vadd.s32 %v1816, 4294967256
    %v1835 = vperm.slane %v551, %v1834
    %vm1836 = vcmask 392512
    %v1837 = vsel %vm1836, %v1835, %v1833
    %v1838 = vadd.s32 %v1816, 4294967248
    %v1839 = vperm.slane %v554, %v1838
    %vm1840 = vcmask 458112
    %v1841 = vsel %vm1840, %v1839, %v1837
    %v1842 = vadd.s32 %v1816, 4294967240
    %v1843 = vperm.slane %v557, %v1842
    %vm1844 = vcmask 523712
    %v1845 = vsel %vm1844, %v1843, %v1841
    %v1846 = vadd.s32 %v1816, 4294967232
    %v1847 = vperm.slane %v560, %v1846
    %vm1848 = vcmask 589312
    %v1849 = vsel %vm1848, %v1847, %v1845
    %v1850 = vadd.s32 %v1816, 4294967224
    %v1851 = vperm.slane %v563, %v1850
    %vm1852 = vcmask 654912
    %v1853 = vsel %vm1852, %v1851, %v1849
    %v1854 = vadd.s32 %v1816, 4294967216
    %v1855 = vperm.slane %v566, %v1854
    %vm1856 = vcmask 720512
    %v1857 = vsel %vm1856, %v1855, %v1853
    %v1858 = vadd.s32 %v1816, 4294967208
    %v1859 = vperm.slane %v569, %v1858
    %vm1860 = vcmask 786112
    %v1861 = vsel %vm1860, %v1859, %v1857
    %v1862 = vadd.s32 %v1816, 4294967200
    %v1863 = vperm.slane %v572, %v1862
    %vm1864 = vcmask 851712
    %v1865 = vsel %vm1864, %v1863, %v1861
    %v1866 = vadd.s32 %v1816, 4294967192
    %v1867 = vperm.slane %v575, %v1866
    %vm1868 = vcmask 917312
    %v1869 = vsel %vm1868, %v1867, %v1865
    %v1870 = vadd.s32 %v1816, 4294967184
    %v1871 = vperm.slane %v578, %v1870
    %vm1872 = vcmask 982912
    %v1873 = vsel %vm1872, %v1871, %v1869
    %v1874 = vadd.s32 %v1816, 4294967176
    %v1875 = vperm.slane %v581, %v1874
    %vm1876 = vcmask 1048512
    %v1877 = vsel %vm1876, %v1875, %v1873
    %v1878 = vperm.slane %v584, %v1816
    %v1879 = vperm.slane %v587, %v1818
    %v1880 = vsel %vm1820, %v1879, %v1878
    %v1881 = vperm.slane %v590, %v1822
    %v1882 = vsel %vm1824, %v1881, %v1880
    %v1883 = vperm.slane %v593, %v1826
    %v1884 = vsel %vm1828, %v1883, %v1882
    %v1885 = vperm.slane %v596, %v1830
    %v1886 = vsel %vm1832, %v1885, %v1884
    %v1887 = vperm.slane %v599, %v1834
    %v1888 = vsel %vm1836, %v1887, %v1886
    %v1889 = vperm.slane %v602, %v1838
    %v1890 = vsel %vm1840, %v1889, %v1888
    %v1891 = vperm.slane %v605, %v1842
    %v1892 = vsel %vm1844, %v1891, %v1890
    %v1893 = vperm.slane %v608, %v1846
    %v1894 = vsel %vm1848, %v1893, %v1892
    %v1895 = vperm.slane %v611, %v1850
    %v1896 = vsel %vm1852, %v1895, %v1894
    %v1897 = vperm.slane %v614, %v1854
    %v1898 = vsel %vm1856, %v1897, %v1896
    %v1899 = vperm.slane %v617, %v1858
    %v1900 = vsel %vm1860, %v1899, %v1898
    %v1901 = vperm.slane %v620, %v1862
    %v1902 = vsel %vm1864, %v1901, %v1900
    %v1903 = vperm.slane %v623, %v1866
    %v1904 = vsel %vm1868, %v1903, %v1902
    %v1905 = vperm.slane %v626, %v1870
    %v1906 = vsel %vm1872, %v1905, %v1904
    %v1907 = vperm.slane %v629, %v1874
    %v1908 = vsel %vm1876, %v1907, %v1906
    %v1909 = vperm.slane %v632, %v1816
    %v1910 = vperm.slane %v635, %v1818
    %v1911 = vsel %vm1820, %v1910, %v1909
    %v1912 = vperm.slane %v638, %v1822
    %v1913 = vsel %vm1824, %v1912, %v1911
    %v1914 = vperm.slane %v641, %v1826
    %v1915 = vsel %vm1828, %v1914, %v1913
    %v1916 = vperm.slane %v644, %v1830
    %v1917 = vsel %vm1832, %v1916, %v1915
    %v1918 = vperm.slane %v647, %v1834
    %v1919 = vsel %vm1836, %v1918, %v1917
    %v1920 = vperm.slane %v650, %v1838
    %v1921 = vsel %vm1840, %v1920, %v1919
    %v1922 = vperm.slane %v653, %v1842
    %v1923 = vsel %vm1844, %v1922, %v1921
    %v1924 = vperm.slane %v656, %v1846
    %v1925 = vsel %vm1848, %v1924, %v1923
    %v1926 = vperm.slane %v659, %v1850
    %v1927 = vsel %vm1852, %v1926, %v1925
    %v1928 = vperm.slane %v662, %v1854
    %v1929 = vsel %vm1856, %v1928, %v1927
    %v1930 = vperm.slane %v665, %v1858
    %v1931 = vsel %vm1860, %v1930, %v1929
    %v1932 = vperm.slane %v668, %v1862
    %v1933 = vsel %vm1864, %v1932, %v1931
    %v1934 = vperm.slane %v671, %v1866
    %v1935 = vsel %vm1868, %v1934, %v1933
    %v1936 = vperm.slane %v674, %v1870
    %v1937 = vsel %vm1872, %v1936, %v1935
    %v1938 = vperm.slane %v677, %v1874
    %v1939 = vsel %vm1876, %v1938, %v1937
    %v1940 = vperm.slane %v680, %v1816
    %v1941 = vperm.slane %v683, %v1818
    %v1942 = vsel %vm1820, %v1941, %v1940
    %v1943 = vperm.slane %v686, %v1822
    %v1944 = vsel %vm1824, %v1943, %v1942
    %v1945 = vperm.slane %v689, %v1826
    %v1946 = vsel %vm1828, %v1945, %v1944
    %v1947 = vperm.slane %v692, %v1830
    %v1948 = vsel %vm1832, %v1947, %v1946
    %v1949 = vperm.slane %v695, %v1834
    %v1950 = vsel %vm1836, %v1949, %v1948
    %v1951 = vperm.slane %v698, %v1838
    %v1952 = vsel %vm1840, %v1951, %v1950
    %v1953 = vperm.slane %v701, %v1842
    %v1954 = vsel %vm1844, %v1953, %v1952
    %v1955 = vperm.slane %v704, %v1846
    %v1956 = vsel %vm1848, %v1955, %v1954
    %v1957 = vperm.slane %v707, %v1850
    %v1958 = vsel %vm1852, %v1957, %v1956
    %v1959 = vperm.slane %v710, %v1854
    %v1960 = vsel %vm1856, %v1959, %v1958
    %v1961 = vperm.slane %v713, %v1858
    %v1962 = vsel %vm1860, %v1961, %v1960
    %v1963 = vperm.slane %v716, %v1862
    %v1964 = vsel %vm1864, %v1963, %v1962
    %v1965 = vperm.slane %v719, %v1866
    %v1966 = vsel %vm1868, %v1965, %v1964
    %v1967 = vperm.slane %v722, %v1870
    %v1968 = vsel %vm1872, %v1967, %v1966
    %v1969 = vperm.slane %v725, %v1874
    %v1970 = vsel %vm1876, %v1969, %v1968
    %v1971 = vperm.slane %v728, %v1816
    %v1972 = vperm.slane %v731, %v1818
    %v1973 = vsel %vm1820, %v1972, %v1971
    %v1974 = vperm.slane %v734, %v1822
    %v1975 = vsel %vm1824, %v1974, %v1973
    %v1976 = vperm.slane %v737, %v1826
    %v1977 = vsel %vm1828, %v1976, %v1975
    %v1978 = vperm.slane %v740, %v1830
    %v1979 = vsel %vm1832, %v1978, %v1977
    %v1980 = vperm.slane %v743, %v1834
    %v1981 = vsel %vm1836, %v1980, %v1979
    %v1982 = vperm.slane %v746, %v1838
    %v1983 = vsel %vm1840, %v1982, %v1981
    %v1984 = vperm.slane %v749, %v1842
    %v1985 = vsel %vm1844, %v1984, %v1983
    %v1986 = vperm.slane %v752, %v1846
    %v1987 = vsel %vm1848, %v1986, %v1985
    %v1988 = vperm.slane %v755, %v1850
    %v1989 = vsel %vm1852, %v1988, %v1987
    %v1990 = vperm.slane %v758, %v1854
    %v1991 = vsel %vm1856, %v1990, %v1989
    %v1992 = vperm.slane %v761, %v1858
    %v1993 = vsel %vm1860, %v1992, %v1991
    %v1994 = vperm.slane %v764, %v1862
    %v1995 = vsel %vm1864, %v1994, %v1993
    %v1996 = vperm.slane %v767, %v1866
    %v1997 = vsel %vm1868, %v1996, %v1995
    %v1998 = vperm.slane %v770, %v1870
    %v1999 = vsel %vm1872, %v1998, %v1997
    %v2000 = vperm.slane %v773, %v1874
    %v2001 = vsel %vm1876, %v2000, %v1999
    %v2002 = vperm.slane %v776, %v1816
    %v2003 = vperm.slane %v779, %v1818
    %v2004 = vsel %vm1820, %v2003, %v2002
    %v2005 = vperm.slane %v782, %v1822
    %v2006 = vsel %vm1824, %v2005, %v2004
    %v2007 = vperm.slane %v785, %v1826
    %v2008 = vsel %vm1828, %v2007, %v2006
    %v2009 = vperm.slane %v788, %v1830
    %v2010 = vsel %vm1832, %v2009, %v2008
    %v2011 = vperm.slane %v791, %v1834
    %v2012 = vsel %vm1836, %v2011, %v2010
    %v2013 = vperm.slane %v794, %v1838
    %v2014 = vsel %vm1840, %v2013, %v2012
    %v2015 = vperm.slane %v797, %v1842
    %v2016 = vsel %vm1844, %v2015, %v2014
    %v2017 = vperm.slane %v800, %v1846
    %v2018 = vsel %vm1848, %v2017, %v2016
    %v2019 = vperm.slane %v803, %v1850
    %v2020 = vsel %vm1852, %v2019, %v2018
    %v2021 = vperm.slane %v806, %v1854
    %v2022 = vsel %vm1856, %v2021, %v2020
    %v2023 = vperm.slane %v809, %v1858
    %v2024 = vsel %vm1860, %v2023, %v2022
    %v2025 = vperm.slane %v812, %v1862
    %v2026 = vsel %vm1864, %v2025, %v2024
    %v2027 = vperm.slane %v815, %v1866
    %v2028 = vsel %vm1868, %v2027, %v2026
    %v2029 = vperm.slane %v818, %v1870
    %v2030 = vsel %vm1872, %v2029, %v2028
    %v2031 = vperm.slane %v821, %v1874
    %v2032 = vsel %vm1876, %v2031, %v2030
    %v2033 = vperm.slane %v824, %v1816
    %v2034 = vperm.slane %v827, %v1818
    %v2035 = vsel %vm1820, %v2034, %v2033
    %v2036 = vperm.slane %v830, %v1822
    %v2037 = vsel %vm1824, %v2036, %v2035
    %v2038 = vperm.slane %v833, %v1826
    %v2039 = vsel %vm1828, %v2038, %v2037
    %v2040 = vperm.slane %v836, %v1830
    %v2041 = vsel %vm1832, %v2040, %v2039
    %v2042 = vperm.slane %v839, %v1834
    %v2043 = vsel %vm1836, %v2042, %v2041
    %v2044 = vperm.slane %v842, %v1838
    %v2045 = vsel %vm1840, %v2044, %v2043
    %v2046 = vperm.slane %v845, %v1842
    %v2047 = vsel %vm1844, %v2046, %v2045
    %v2048 = vperm.slane %v848, %v1846
    %v2049 = vsel %vm1848, %v2048, %v2047
    %v2050 = vperm.slane %v851, %v1850
    %v2051 = vsel %vm1852, %v2050, %v2049
    %v2052 = vperm.slane %v854, %v1854
    %v2053 = vsel %vm1856, %v2052, %v2051
    %v2054 = vperm.slane %v857, %v1858
    %v2055 = vsel %vm1860, %v2054, %v2053
    %v2056 = vperm.slane %v860, %v1862
    %v2057 = vsel %vm1864, %v2056, %v2055
    %v2058 = vperm.slane %v863, %v1866
    %v2059 = vsel %vm1868, %v2058, %v2057
    %v2060 = vperm.slane %v866, %v1870
    %v2061 = vsel %vm1872, %v2060, %v2059
    %v2062 = vperm.slane %v869, %v1874
    %v2063 = vsel %vm1876, %v2062, %v2061
    %v2064 = vperm.slane %v872, %v1816
    %v2065 = vperm.slane %v875, %v1818
    %v2066 = vsel %vm1820, %v2065, %v2064
    %v2067 = vperm.slane %v878, %v1822
    %v2068 = vsel %vm1824, %v2067, %v2066
    %v2069 = vperm.slane %v881, %v1826
    %v2070 = vsel %vm1828, %v2069, %v2068
    %v2071 = vperm.slane %v884, %v1830
    %v2072 = vsel %vm1832, %v2071, %v2070
    %v2073 = vperm.slane %v887, %v1834
    %v2074 = vsel %vm1836, %v2073, %v2072
    %v2075 = vperm.slane %v890, %v1838
    %v2076 = vsel %vm1840, %v2075, %v2074
    %v2077 = vperm.slane %v893, %v1842
    %v2078 = vsel %vm1844, %v2077, %v2076
    %v2079 = vperm.slane %v896, %v1846
    %v2080 = vsel %vm1848, %v2079, %v2078
    %v2081 = vperm.slane %v899, %v1850
    %v2082 = vsel %vm1852, %v2081, %v2080
    %v2083 = vperm.slane %v902, %v1854
    %v2084 = vsel %vm1856, %v2083, %v2082
    %v2085 = vperm.slane %v905, %v1858
    %v2086 = vsel %vm1860, %v2085, %v2084
    %v2087 = vperm.slane %v908, %v1862
    %v2088 = vsel %vm1864, %v2087, %v2086
    %v2089 = vperm.slane %v911, %v1866
    %v2090 = vsel %vm1868, %v2089, %v2088
    %v2091 = vperm.slane %v914, %v1870
    %v2092 = vsel %vm1872, %v2091, %v2090
    %v2093 = vperm.slane %v917, %v1874
    %v2094 = vsel %vm1876, %v2093, %v2092
    %v2095 = vperm.slane %v920, %v1816
    %v2096 = vperm.slane %v923, %v1818
    %v2097 = vsel %vm1820, %v2096, %v2095
    %v2098 = vperm.slane %v926, %v1822
    %v2099 = vsel %vm1824, %v2098, %v2097
    %v2100 = vperm.slane %v929, %v1826
    %v2101 = vsel %vm1828, %v2100, %v2099
    %v2102 = vperm.slane %v932, %v1830
    %v2103 = vsel %vm1832, %v2102, %v2101
    %v2104 = vperm.slane %v935, %v1834
    %v2105 = vsel %vm1836, %v2104, %v2103
    %v2106 = vperm.slane %v938, %v1838
    %v2107 = vsel %vm1840, %v2106, %v2105
    %v2108 = vperm.slane %v941, %v1842
    %v2109 = vsel %vm1844, %v2108, %v2107
    %v2110 = vperm.slane %v944, %v1846
    %v2111 = vsel %vm1848, %v2110, %v2109
    %v2112 = vperm.slane %v947, %v1850
    %v2113 = vsel %vm1852, %v2112, %v2111
    %v2114 = vperm.slane %v950, %v1854
    %v2115 = vsel %vm1856, %v2114, %v2113
    %v2116 = vperm.slane %v953, %v1858
    %v2117 = vsel %vm1860, %v2116, %v2115
    %v2118 = vperm.slane %v956, %v1862
    %v2119 = vsel %vm1864, %v2118, %v2117
    %v2120 = vperm.slane %v959, %v1866
    %v2121 = vsel %vm1868, %v2120, %v2119
    %v2122 = vperm.slane %v962, %v1870
    %v2123 = vsel %vm1872, %v2122, %v2121
    %v2124 = vperm.slane %v965, %v1874
    %v2125 = vsel %vm1876, %v2124, %v2123
    %v2126 = vperm.slane %v968, %v1816
    %v2127 = vperm.slane %v971, %v1818
    %v2128 = vsel %vm1820, %v2127, %v2126
    %v2129 = vperm.slane %v974, %v1822
    %v2130 = vsel %vm1824, %v2129, %v2128
    %v2131 = vperm.slane %v977, %v1826
    %v2132 = vsel %vm1828, %v2131, %v2130
    %v2133 = vperm.slane %v980, %v1830
    %v2134 = vsel %vm1832, %v2133, %v2132
    %v2135 = vperm.slane %v983, %v1834
    %v2136 = vsel %vm1836, %v2135, %v2134
    %v2137 = vperm.slane %v986, %v1838
    %v2138 = vsel %vm1840, %v2137, %v2136
    %v2139 = vperm.slane %v989, %v1842
    %v2140 = vsel %vm1844, %v2139, %v2138
    %v2141 = vperm.slane %v992, %v1846
    %v2142 = vsel %vm1848, %v2141, %v2140
    %v2143 = vperm.slane %v995, %v1850
    %v2144 = vsel %vm1852, %v2143, %v2142
    %v2145 = vperm.slane %v998, %v1854
    %v2146 = vsel %vm1856, %v2145, %v2144
    %v2147 = vperm.slane %v1001, %v1858
    %v2148 = vsel %vm1860, %v2147, %v2146
    %v2149 = vperm.slane %v1004, %v1862
    %v2150 = vsel %vm1864, %v2149, %v2148
    %v2151 = vperm.slane %v1007, %v1866
    %v2152 = vsel %vm1868, %v2151, %v2150
    %v2153 = vperm.slane %v1010, %v1870
    %v2154 = vsel %vm1872, %v2153, %v2152
    %v2155 = vperm.slane %v1013, %v1874
    %v2156 = vsel %vm1876, %v2155, %v2154
    %v2157 = vperm.slane %v1016, %v1816
    %v2158 = vperm.slane %v1019, %v1818
    %v2159 = vsel %vm1820, %v2158, %v2157
    %v2160 = vperm.slane %v1022, %v1822
    %v2161 = vsel %vm1824, %v2160, %v2159
    %v2162 = vperm.slane %v1025, %v1826
    %v2163 = vsel %vm1828, %v2162, %v2161
    %v2164 = vperm.slane %v1028, %v1830
    %v2165 = vsel %vm1832, %v2164, %v2163
    %v2166 = vperm.slane %v1031, %v1834
    %v2167 = vsel %vm1836, %v2166, %v2165
    %v2168 = vperm.slane %v1034, %v1838
    %v2169 = vsel %vm1840, %v2168, %v2167
    %v2170 = vperm.slane %v1037, %v1842
    %v2171 = vsel %vm1844, %v2170, %v2169
    %v2172 = vperm.slane %v1040, %v1846
    %v2173 = vsel %vm1848, %v2172, %v2171
    %v2174 = vperm.slane %v1043, %v1850
    %v2175 = vsel %vm1852, %v2174, %v2173
    %v2176 = vperm.slane %v1046, %v1854
    %v2177 = vsel %vm1856, %v2176, %v2175
    %v2178 = vperm.slane %v1049, %v1858
    %v2179 = vsel %vm1860, %v2178, %v2177
    %v2180 = vperm.slane %v1052, %v1862
    %v2181 = vsel %vm1864, %v2180, %v2179
    %v2182 = vperm.slane %v1055, %v1866
    %v2183 = vsel %vm1868, %v2182, %v2181
    %v2184 = vperm.slane %v1058, %v1870
    %v2185 = vsel %vm1872, %v2184, %v2183
    %v2186 = vperm.slane %v1061, %v1874
    %v2187 = vsel %vm1876, %v2186, %v2185
    %v2188 = vperm.slane %v1064, %v1816
    %v2189 = vperm.slane %v1067, %v1818
    %v2190 = vsel %vm1820, %v2189, %v2188
    %v2191 = vperm.slane %v1070, %v1822
    %v2192 = vsel %vm1824, %v2191, %v2190
    %v2193 = vperm.slane %v1073, %v1826
    %v2194 = vsel %vm1828, %v2193, %v2192
    %v2195 = vperm.slane %v1076, %v1830
    %v2196 = vsel %vm1832, %v2195, %v2194
    %v2197 = vperm.slane %v1079, %v1834
    %v2198 = vsel %vm1836, %v2197, %v2196
    %v2199 = vperm.slane %v1082, %v1838
    %v2200 = vsel %vm1840, %v2199, %v2198
    %v2201 = vperm.slane %v1085, %v1842
    %v2202 = vsel %vm1844, %v2201, %v2200
    %v2203 = vperm.slane %v1088, %v1846
    %v2204 = vsel %vm1848, %v2203, %v2202
    %v2205 = vperm.slane %v1091, %v1850
    %v2206 = vsel %vm1852, %v2205, %v2204
    %v2207 = vperm.slane %v1094, %v1854
    %v2208 = vsel %vm1856, %v2207, %v2206
    %v2209 = vperm.slane %v1097, %v1858
    %v2210 = vsel %vm1860, %v2209, %v2208
    %v2211 = vperm.slane %v1100, %v1862
    %v2212 = vsel %vm1864, %v2211, %v2210
    %v2213 = vperm.slane %v1103, %v1866
    %v2214 = vsel %vm1868, %v2213, %v2212
    %v2215 = vperm.slane %v1106, %v1870
    %v2216 = vsel %vm1872, %v2215, %v2214
    %v2217 = vperm.slane %v1109, %v1874
    %v2218 = vsel %vm1876, %v2217, %v2216
    %v2219 = vperm.slane %v1112, %v1816
    %v2220 = vperm.slane %v1115, %v1818
    %v2221 = vsel %vm1820, %v2220, %v2219
    %v2222 = vperm.slane %v1118, %v1822
    %v2223 = vsel %vm1824, %v2222, %v2221
    %v2224 = vperm.slane %v1121, %v1826
    %v2225 = vsel %vm1828, %v2224, %v2223
    %v2226 = vperm.slane %v1124, %v1830
    %v2227 = vsel %vm1832, %v2226, %v2225
    %v2228 = vperm.slane %v1127, %v1834
    %v2229 = vsel %vm1836, %v2228, %v2227
    %v2230 = vperm.slane %v1130, %v1838
    %v2231 = vsel %vm1840, %v2230, %v2229
    %v2232 = vperm.slane %v1133, %v1842
    %v2233 = vsel %vm1844, %v2232, %v2231
    %v2234 = vperm.slane %v1136, %v1846
    %v2235 = vsel %vm1848, %v2234, %v2233
    %v2236 = vperm.slane %v1139, %v1850
    %v2237 = vsel %vm1852, %v2236, %v2235
    %v2238 = vperm.slane %v1142, %v1854
    %v2239 = vsel %vm1856, %v2238, %v2237
    %v2240 = vperm.slane %v1145, %v1858
    %v2241 = vsel %vm1860, %v2240, %v2239
    %v2242 = vperm.slane %v1148, %v1862
    %v2243 = vsel %vm1864, %v2242, %v2241
    %v2244 = vperm.slane %v1151, %v1866
    %v2245 = vsel %vm1868, %v2244, %v2243
    %v2246 = vperm.slane %v1154, %v1870
    %v2247 = vsel %vm1872, %v2246, %v2245
    %v2248 = vperm.slane %v1157, %v1874
    %v2249 = vsel %vm1876, %v2248, %v2247
    %v2250 = vperm.slane %v1160, %v1816
    %v2251 = vperm.slane %v1163, %v1818
    %v2252 = vsel %vm1820, %v2251, %v2250
    %v2253 = vperm.slane %v1166, %v1822
    %v2254 = vsel %vm1824, %v2253, %v2252
    %v2255 = vperm.slane %v1169, %v1826
    %v2256 = vsel %vm1828, %v2255, %v2254
    %v2257 = vperm.slane %v1172, %v1830
    %v2258 = vsel %vm1832, %v2257, %v2256
    %v2259 = vperm.slane %v1175, %v1834
    %v2260 = vsel %vm1836, %v2259, %v2258
    %v2261 = vperm.slane %v1178, %v1838
    %v2262 = vsel %vm1840, %v2261, %v2260
    %v2263 = vperm.slane %v1181, %v1842
    %v2264 = vsel %vm1844, %v2263, %v2262
    %v2265 = vperm.slane %v1184, %v1846
    %v2266 = vsel %vm1848, %v2265, %v2264
    %v2267 = vperm.slane %v1187, %v1850
    %v2268 = vsel %vm1852, %v2267, %v2266
    %v2269 = vperm.slane %v1190, %v1854
    %v2270 = vsel %vm1856, %v2269, %v2268
    %v2271 = vperm.slane %v1193, %v1858
    %v2272 = vsel %vm1860, %v2271, %v2270
    %v2273 = vperm.slane %v1196, %v1862
    %v2274 = vsel %vm1864, %v2273, %v2272
    %v2275 = vperm.slane %v1199, %v1866
    %v2276 = vsel %vm1868, %v2275, %v2274
    %v2277 = vperm.slane %v1202, %v1870
    %v2278 = vsel %vm1872, %v2277, %v2276
    %v2279 = vperm.slane %v1205, %v1874
    %v2280 = vsel %vm1876, %v2279, %v2278
    %v2281 = vperm.slane %v1208, %v1816
    %v2282 = vperm.slane %v1211, %v1818
    %v2283 = vsel %vm1820, %v2282, %v2281
    %v2284 = vperm.slane %v1214, %v1822
    %v2285 = vsel %vm1824, %v2284, %v2283
    %v2286 = vperm.slane %v1217, %v1826
    %v2287 = vsel %vm1828, %v2286, %v2285
    %v2288 = vperm.slane %v1220, %v1830
    %v2289 = vsel %vm1832, %v2288, %v2287
    %v2290 = vperm.slane %v1223, %v1834
    %v2291 = vsel %vm1836, %v2290, %v2289
    %v2292 = vperm.slane %v1226, %v1838
    %v2293 = vsel %vm1840, %v2292, %v2291
    %v2294 = vperm.slane %v1229, %v1842
    %v2295 = vsel %vm1844, %v2294, %v2293
    %v2296 = vperm.slane %v1232, %v1846
    %v2297 = vsel %vm1848, %v2296, %v2295
    %v2298 = vperm.slane %v1235, %v1850
    %v2299 = vsel %vm1852, %v2298, %v2297
    %v2300 = vperm.slane %v1238, %v1854
    %v2301 = vsel %vm1856, %v2300, %v2299
    %v2302 = vperm.slane %v1241, %v1858
    %v2303 = vsel %vm1860, %v2302, %v2301
    %v2304 = vperm.slane %v1244, %v1862
    %v2305 = vsel %vm1864, %v2304, %v2303
    %v2306 = vperm.slane %v1247, %v1866
    %v2307 = vsel %vm1868, %v2306, %v2305
    %v2308 = vperm.slane %v1250, %v1870
    %v2309 = vsel %vm1872, %v2308, %v2307
    %v2310 = vperm.slane %v1253, %v1874
    %v2311 = vsel %vm1876, %v2310, %v2309
    %v2312 = vperm.slane %v1256, %v1816
    %v2313 = vperm.slane %v1259, %v1818
    %v2314 = vsel %vm1820, %v2313, %v2312
    %v2315 = vperm.slane %v1262, %v1822
    %v2316 = vsel %vm1824, %v2315, %v2314
    %v2317 = vperm.slane %v1265, %v1826
    %v2318 = vsel %vm1828, %v2317, %v2316
    %v2319 = vperm.slane %v1268, %v1830
    %v2320 = vsel %vm1832, %v2319, %v2318
    %v2321 = vperm.slane %v1271, %v1834
    %v2322 = vsel %vm1836, %v2321, %v2320
    %v2323 = vperm.slane %v1274, %v1838
    %v2324 = vsel %vm1840, %v2323, %v2322
    %v2325 = vperm.slane %v1277, %v1842
    %v2326 = vsel %vm1844, %v2325, %v2324
    %v2327 = vperm.slane %v1280, %v1846
    %v2328 = vsel %vm1848, %v2327, %v2326
    %v2329 = vperm.slane %v1283, %v1850
    %v2330 = vsel %vm1852, %v2329, %v2328
    %v2331 = vperm.slane %v1286, %v1854
    %v2332 = vsel %vm1856, %v2331, %v2330
    %v2333 = vperm.slane %v1289, %v1858
    %v2334 = vsel %vm1860, %v2333, %v2332
    %v2335 = vperm.slane %v1292, %v1862
    %v2336 = vsel %vm1864, %v2335, %v2334
    %v2337 = vperm.slane %v1295, %v1866
    %v2338 = vsel %vm1868, %v2337, %v2336
    %v2339 = vperm.slane %v1298, %v1870
    %v2340 = vsel %vm1872, %v2339, %v2338
    %v2341 = vperm.slane %v1301, %v1874
    %v2342 = vsel %vm1876, %v2341, %v2340
    %vm2343 = vcmask 1041409
    %v2344 = vsel %vm2343, %v2125, %v1877
    %v2345 = vsel %vm2343, %v2156, %v1908
    %v2346 = vsel %vm2343, %v2187, %v1939
    %v2347 = vsel %vm2343, %v2218, %v1970
    %v2348 = vsel %vm2343, %v2249, %v2001
    %v2349 = vsel %vm2343, %v2280, %v2032
    %v2350 = vsel %vm2343, %v2311, %v2063
    %v2351 = vsel %vm2343, %v2342, %v2094
    %2360 = vmatpush.msra.mxu0 %v1446
    %2361 = vmatpush.msra.mxu0 %v1445
    %2362 = vmatpush.msra.mxu0 %v1444
    %2363 = vmatpush.msra.mxu0 %v1443
    %2364 = vmatpush.msra.mxu0 %v1442
    %2365 = vmatpush.msra.mxu0 %v1441
    %2366 = vmatpush.msra.mxu0 %v1440
    %2367 = vmatpush.msra.mxu0 %v1439
    %2368 = vmatpush.msra.mxu0 %v1438
    %2369 = vmatpush.msra.mxu0 %v1437
    %2370 = vmatpush.msra.mxu0 %v1436
    %2371 = vmatpush.msra.mxu0 %v1435
    %2372 = vmatpush.msra.mxu0 %v1434
    %2373 = vmatpush.msra.mxu0 %v1433
    %2374 = vmatpush.msra.mxu0 %v1432
    %2375 = vmatpush.msra.mxu0 %v1431
    %2376 = vmatmul.f32.gmra.mxu0 %v2344
    %v2377 = vpop.f32.mrf.mxu0
    %v2378 = vadd.f32 0.0, %v2377
    %2379 = vdwg.mxu0
    %2380 = vmatpush.msra.mxu0 %v1462
    %2381 = vmatpush.msra.mxu0 %v1461
    %2382 = vmatpush.msra.mxu0 %v1460
    %2383 = vmatpush.msra.mxu0 %v1459
    %2384 = vmatpush.msra.mxu0 %v1458
    %2385 = vmatpush.msra.mxu0 %v1457
    %2386 = vmatpush.msra.mxu0 %v1456
    %2387 = vmatpush.msra.mxu0 %v1455
    %2388 = vmatpush.msra.mxu0 %v1454
    %2389 = vmatpush.msra.mxu0 %v1453
    %2390 = vmatpush.msra.mxu0 %v1452
    %2391 = vmatpush.msra.mxu0 %v1451
    %2392 = vmatpush.msra.mxu0 %v1450
    %2393 = vmatpush.msra.mxu0 %v1449
    %2394 = vmatpush.msra.mxu0 %v1448
    %2395 = vmatpush.msra.mxu0 %v1447
    %2396 = vmatmul.f32.gmra.mxu0 %v2345
    %v2397 = vpop.f32.mrf.mxu0
    %v2398 = vadd.f32 %v2378, %v2397
    %2399 = vdwg.mxu0
    %2400 = vmatpush.msra.mxu0 %v1478
    %2401 = vmatpush.msra.mxu0 %v1477
    %2402 = vmatpush.msra.mxu0 %v1476
    %2403 = vmatpush.msra.mxu0 %v1475
    %2404 = vmatpush.msra.mxu0 %v1474
    %2405 = vmatpush.msra.mxu0 %v1473
    %2406 = vmatpush.msra.mxu0 %v1472
    %2407 = vmatpush.msra.mxu0 %v1471
    %2408 = vmatpush.msra.mxu0 %v1470
    %2409 = vmatpush.msra.mxu0 %v1469
    %2410 = vmatpush.msra.mxu0 %v1468
    %2411 = vmatpush.msra.mxu0 %v1467
    %2412 = vmatpush.msra.mxu0 %v1466
    %2413 = vmatpush.msra.mxu0 %v1465
    %2414 = vmatpush.msra.mxu0 %v1464
    %2415 = vmatpush.msra.mxu0 %v1463
    %2416 = vmatmul.f32.gmra.mxu0 %v2346
    %v2417 = vpop.f32.mrf.mxu0
    %v2418 = vadd.f32 %v2398, %v2417
    %2419 = vdwg.mxu0
    %2420 = vmatpush.msra.mxu0 %v1494
    %2421 = vmatpush.msra.mxu0 %v1493
    %2422 = vmatpush.msra.mxu0 %v1492
    %2423 = vmatpush.msra.mxu0 %v1491
    %2424 = vmatpush.msra.mxu0 %v1490
    %2425 = vmatpush.msra.mxu0 %v1489
    %2426 = vmatpush.msra.mxu0 %v1488
    %2427 = vmatpush.msra.mxu0 %v1487
    %2428 = vmatpush.msra.mxu0 %v1486
    %2429 = vmatpush.msra.mxu0 %v1485
    %2430 = vmatpush.msra.mxu0 %v1484
    %2431 = vmatpush.msra.mxu0 %v1483
    %2432 = vmatpush.msra.mxu0 %v1482
    %2433 = vmatpush.msra.mxu0 %v1481
    %2434 = vmatpush.msra.mxu0 %v1480
    %2435 = vmatpush.msra.mxu0 %v1479
    %2436 = vmatmul.f32.gmra.mxu0 %v2347
    %v2437 = vpop.f32.mrf.mxu0
    %v2438 = vadd.f32 %v2418, %v2437
    %2439 = vdwg.mxu0
    %2440 = vmatpush.msra.mxu0 %v1510
    %2441 = vmatpush.msra.mxu0 %v1509
    %2442 = vmatpush.msra.mxu0 %v1508
    %2443 = vmatpush.msra.mxu0 %v1507
    %2444 = vmatpush.msra.mxu0 %v1506
    %2445 = vmatpush.msra.mxu0 %v1505
    %2446 = vmatpush.msra.mxu0 %v1504
    %2447 = vmatpush.msra.mxu0 %v1503
    %2448 = vmatpush.msra.mxu0 %v1502
    %2449 = vmatpush.msra.mxu0 %v1501
    %2450 = vmatpush.msra.mxu0 %v1500
    %2451 = vmatpush.msra.mxu0 %v1499
    %2452 = vmatpush.msra.mxu0 %v1498
    %2453 = vmatpush.msra.mxu0 %v1497
    %2454 = vmatpush.msra.mxu0 %v1496
    %2455 = vmatpush.msra.mxu0 %v1495
    %2456 = vmatmul.f32.gmra.mxu0 %v2348
    %v2457 = vpop.f32.mrf.mxu0
    %v2458 = vadd.f32 %v2438, %v2457
    %2459 = vdwg.mxu0
    %2460 = vmatpush.msra.mxu0 %v1526
    %2461 = vmatpush.msra.mxu0 %v1525
    %2462 = vmatpush.msra.mxu0 %v1524
    %2463 = vmatpush.msra.mxu0 %v1523
    %2464 = vmatpush.msra.mxu0 %v1522
    %2465 = vmatpush.msra.mxu0 %v1521
    %2466 = vmatpush.msra.mxu0 %v1520
    %2467 = vmatpush.msra.mxu0 %v1519
    %2468 = vmatpush.msra.mxu0 %v1518
    %2469 = vmatpush.msra.mxu0 %v1517
    %2470 = vmatpush.msra.mxu0 %v1516
    %2471 = vmatpush.msra.mxu0 %v1515
    %2472 = vmatpush.msra.mxu0 %v1514
    %2473 = vmatpush.msra.mxu0 %v1513
    %2474 = vmatpush.msra.mxu0 %v1512
    %2475 = vmatpush.msra.mxu0 %v1511
    %2476 = vmatmul.f32.gmra.mxu0 %v2349
    %v2477 = vpop.f32.mrf.mxu0
    %v2478 = vadd.f32 %v2458, %v2477
    %2479 = vdwg.mxu0
    %2480 = vmatpush.msra.mxu0 %v1542
    %2481 = vmatpush.msra.mxu0 %v1541
    %2482 = vmatpush.msra.mxu0 %v1540
    %2483 = vmatpush.msra.mxu0 %v1539
    %2484 = vmatpush.msra.mxu0 %v1538
    %2485 = vmatpush.msra.mxu0 %v1537
    %2486 = vmatpush.msra.mxu0 %v1536
    %2487 = vmatpush.msra.mxu0 %v1535
    %2488 = vmatpush.msra.mxu0 %v1534
    %2489 = vmatpush.msra.mxu0 %v1533
    %2490 = vmatpush.msra.mxu0 %v1532
    %2491 = vmatpush.msra.mxu0 %v1531
    %2492 = vmatpush.msra.mxu0 %v1530
    %2493 = vmatpush.msra.mxu0 %v1529
    %2494 = vmatpush.msra.mxu0 %v1528
    %2495 = vmatpush.msra.mxu0 %v1527
    %2496 = vmatmul.f32.gmra.mxu0 %v2350
    %v2497 = vpop.f32.mrf.mxu0
    %v2498 = vadd.f32 %v2478, %v2497
    %2499 = vdwg.mxu0
    %2500 = vmatpush.msra.mxu0 %v1558
    %2501 = vmatpush.msra.mxu0 %v1557
    %2502 = vmatpush.msra.mxu0 %v1556
    %2503 = vmatpush.msra.mxu0 %v1555
    %2504 = vmatpush.msra.mxu0 %v1554
    %2505 = vmatpush.msra.mxu0 %v1553
    %2506 = vmatpush.msra.mxu0 %v1552
    %2507 = vmatpush.msra.mxu0 %v1551
    %2508 = vmatpush.msra.mxu0 %v1550
    %2509 = vmatpush.msra.mxu0 %v1549
    %2510 = vmatpush.msra.mxu0 %v1548
    %2511 = vmatpush.msra.mxu0 %v1547
    %2512 = vmatpush.msra.mxu0 %v1546
    %2513 = vmatpush.msra.mxu0 %v1545
    %2514 = vmatpush.msra.mxu0 %v1544
    %2515 = vmatpush.msra.mxu0 %v1543
    %2516 = vmatmul.f32.gmra.mxu0 %v2351
    %v2517 = vpop.f32.mrf.mxu0
    %v2518 = vadd.f32 %v2498, %v2517
    %2519 = vdwg.mxu0
    %v2520 = vadd.f32 %v1302, %v2518
    %vm2521 = vcmask 861184
    %2522 = vst.msk [vmem:[#allocation2] sm:$0x3] %vm2521, %v2520
    // Predicated region
    $region18: #{head_forward.1} parent=1 // pred_check
      %p2523 = pneg %p15
    $region19: #{head_forward.1} parent=1 // pred_check_branch
      %2525 = sbr.rel (%p2523) target = $region21
    $region20: #{head_forward.1} parent=1 // pred_region
      %v2526 = vld [vmem:[#allocation2] sm:$0x3]
      %v2527 = vmul.f32 %v2526, 0.010204081
      %v2528 = vld [vmem:[%s2] sm:$0x1]
      %v2530 = vperm.slane %v2528, 0
      %v2532 = vadd.f32 %v2527, %v2530
      %2533 = vst.msk [vmem:[#allocation2] sm:$0x3] %vm2521, %v2532
    $region21: #{head_forward.1} parent=1 // pred_fallthru
      _
    // Predicated region
    $region22: #{head_forward.1} parent=1 // pred_check
      _
    $region23: #{head_forward.1} parent=1 // pred_check_branch
      %2535 = sbr.rel (0) target = $region25
    $region24: #{head_forward.1} parent=1 // pred_region
      %2537 = vsyncadd [#allocation3], 0
      %s2539 = sshll.u32 [#allocation2], 4
      %s2540 = int_to_ptr.vmem [resolvable:$true] %s2539
      %s2541 = sshll.u32 %s3, 4
      %s2542 = int_to_ptr.hbm [resolvable:$true] %s2541
      %2544 = dma.vmem_to_hbm [thread:$0]  %s2540, 32, %s2542, [#allocation3]
    $region25: #{head_forward.1} parent=1 // pred_fallthru
      _
    // Predicated region
    $region26: #{head_forward.1} parent=1 // pred_check
      _
    $region27: #{head_forward.1} parent=1 // pred_check_branch
      %2546 = sbr.rel (0) target = $region29
    $region28: #{head_forward.1} parent=1 // pred_region
      %2548 = dma.done [#allocation3], 32
    $region29: #{head_forward.1} parent=1 // pred_fallthru
      _
    %2549 = vsyncpa [#allocation3], 1

</llo_original>
